<compile_context>
chip_gen: v7x
topology: tpu7x:2x2x1
jax: 0.10.0
libtpu: 0.0.40
codegen_flags: <defaults>
</compile_context>

<pallas_src>
import jax
import jax.numpy as jnp
from jax import lax
from jax.experimental import pallas as pl
from jax.experimental.pallas import tpu as pltpu


def _make_qsmih_kernel(one_hot: bool, use_square_clamp: bool, alpha: float,
                       tm: int, n: int, bit: int):
    """Kernel factory: config flags / shapes are static (baked at trace time)."""
    inv_n2 = 1.0 / (float(n) * float(n))
    inv_nbit = 1.0 / (float(n) * float(bit))
    dn = (((1,), (1,)), ((), ()))  # contract last dim of both operands (no .T)

    def _strip_body(invm_ref, u_ref, out_ref, un_ref, acc_ref, hs_ref, d_fn):
        i = pl.program_id(0)

        # ---- step 0: normalize u once, init accumulators, hash-loss sum ----
        @pl.when(i == 0)
        def _init():
            u = u_ref[...].astype(jnp.float32)                       # (N, bit)
            ssq = jnp.sum(u * u, axis=1, keepdims=True)
            un = u * pl.reciprocal(jnp.sqrt(ssq) + 1e-8)             # EUP
            un_ref[...] = un
            acc_ref[...] = jnp.zeros_like(acc_ref)
            hs_ref[0] = jnp.sum(jnp.abs(jnp.abs(un) - 1.0))

        # ---- per-strip Gram + fused loss surface -> lane-wise partials ----
        row0 = pl.multiple_of(i * tm, tm)
        un_strip = un_ref[pl.ds(row0, tm), :]                        # (TM, bit)
        ys = lax.dot_general(un_strip, un_ref[...], dn,
                             preferred_element_type=jnp.float32)     # (TM, N)
        ys = 0.5 * (ys + 1.0)

        d = d_fn(row0)                                               # (TM, N) bool
        inv_m = invm_ref[0]                                          # SMEM scalar

        if use_square_clamp:
            # D==1: (Y-1)^2 ; D==0: (0-1)^2 = 1   (+ Q_btw term)
            tile = jnp.where(d, (ys - 1.0) ** 2, 1.0) + inv_m * (ys * ys)
        else:
            tile = inv_m * ys - jnp.where(d, ys, 0.0)

        # Sublane-only partial reduction into a resident (1, N) accumulator.
        acc_ref[...] = acc_ref[...] + jnp.sum(tile, axis=0, keepdims=True)

        # ---- last step: single cross-lane reduce + scalar combine ----
        @pl.when(i == pl.num_programs(0) - 1)
        def _finalize():
            l_qsmi = jnp.sum(acc_ref[...]) * inv_n2
            out_ref[0, 0] = l_qsmi + alpha * hs_ref[0] * inv_nbit

    if one_hot:
        def kernel(invm_ref, u_ref, labc_ref, labr_ref, out_ref,
                   un_ref, acc_ref, hs_ref):
            def d_fn(row0):
                # Pure VPU broadcast-compare; no MXU pass for the labels.
                return labc_ref[pl.ds(row0, tm), :] == labr_ref[...]
            _strip_body(invm_ref, u_ref, out_ref, un_ref, acc_ref, hs_ref, d_fn)
    else:
        def kernel(invm_ref, u_ref, y_ref, out_ref,
                   un_ref, acc_ref, hs_ref):
            def d_fn(row0):
                y_strip = y_ref[pl.ds(row0, tm), :].astype(jnp.float32)
                yy = lax.dot_general(y_strip, y_ref[...].astype(jnp.float32), dn,
                                     preferred_element_type=jnp.float32)
                return yy > 0.0
            _strip_body(invm_ref, u_ref, out_ref, un_ref, acc_ref, hs_ref, d_fn)

    return kernel


def _vmem_budget_bytes() -> int:
    """~75% of this generation's VMEM (v5e/v6e: ~96 MiB, v7x: ~48 MiB)."""
    try:
        cap = int(pltpu.get_tpu_info().vmem_capacity_bytes)
    except Exception:
        cap = 64 * 1024 * 1024
    return max(16 * 1024 * 1024, (cap * 3) // 4)


def _pick_tm(n: int, bit: int, budget_bytes: int) -> int:
    """Largest strip height dividing N whose working set fits the VMEM budget."""
    lanes = 128
    resident = 3 * 4 * n * max(bit, lanes)        # un scratch + 2x u input bufs
    resident += 2 * (4 * n * lanes + 4 * 8 * n)   # label col/row blocks
    resident += 4 * 8 * n                         # (1, N) accumulator (padded)
    divisors = [t for t in (1024, 512, 256, 128, 64, 32, 16, 8)
                if t <= n and n % t == 0]
    for t in divisors:                            # largest first
        if resident + 5 * t * n * 4 <= budget_bytes:
            return t
    return divisors[-1] if divisors else n


def qsmih_loss(u, y, ind, config, *, tm=None, labels_one_hot=True):
    """Pallas wrapper mirroring QSMIHLoss.forward(u, y, ind, config)."""
    del ind  # unused by the reference module
    n, bit = u.shape
    ny, c = y.shape
    assert ny == n
    use_sq = bool(config["use_square_clamp"])
    alpha = float(config["alpha"])

    budget = _vmem_budget_bytes()
    if tm is None:
        tm = _pick_tm(n, bit, budget)
    assert n % tm == 0, "strip height must divide N"
    nsteps = n // tm

    y32 = y.astype(jnp.float32)
    if labels_one_hot:
        # D_ij = (label_i == label_j); sum(D) = sum_c n_c^2 (exact for one-hot).
        lab = jnp.argmax(y32, axis=1).astype(jnp.float32)
        lab_col = lab.reshape(n, 1)
        lab_row = lab.reshape(1, n)
        counts = jnp.sum(y32, axis=0)
        sum_d = jnp.sum(counts * counts)
        extra_args = (lab_col, lab_row)
        extra_specs = [pl.BlockSpec((n, 1), lambda i: (0, 0)),
                       pl.BlockSpec((1, n), lambda i: (0, 0))]
        extra_flops, extra_bytes = 0, 2 * 4 * n
    else:
        # TODO(synk): fallback recomputes the label Gram once in XLA only to get
        # sum(D); for multi-hot-heavy workloads accumulate sum(D) in-kernel.
        sum_d = jnp.sum((jnp.dot(y32, y32.T) > 0.0).astype(jnp.float32))
        extra_args = (y32,)
        extra_specs = [pl.BlockSpec((n, c), lambda i: (0, 0))]
        extra_flops, extra_bytes = 2 * n * n * c, 4 * n * c

    inv_m = (sum_d * (1.0 / (float(n) * float(n)))).astype(jnp.float32).reshape(1)

    kernel = _make_qsmih_kernel(labels_one_hot, use_sq, alpha, tm, n, bit)

    cost = pl.CostEstimate(
        flops=int(2 * n * n * bit + 8 * n * n + 4 * n * bit + extra_flops),
        transcendentals=int(2 * n),
        bytes_accessed=int(4 * n * bit + extra_bytes + 8),
    )

    out = pl.pallas_call(
        kernel,
        out_shape=jax.ShapeDtypeStruct((1, 1), jnp.float32),
        grid=(nsteps,),
        in_specs=[pl.BlockSpec(memory_space=pltpu.MemorySpace.SMEM),  # inv_m
                  pl.BlockSpec((n, bit), lambda i: (0, 0))            # u resident
                  ] + extra_specs,
        out_specs=pl.BlockSpec(memory_space=pltpu.MemorySpace.SMEM),
        scratch_shapes=[
            pltpu.VMEM((n, bit), jnp.float32),   # normalized u (persists)
            pltpu.VMEM((1, n), jnp.float32),     # lane-wise loss partial sums
            pltpu.SMEM((1,), jnp.float32),       # hash-loss sum
        ],
        compiler_params=pltpu.CompilerParams(
            dimension_semantics=("arbitrary",),  # carried accumulators
            vmem_limit_bytes=int(budget),
        ),
        cost_estimate=cost,
    )(inv_m, u, *extra_args)
    return out[0, 0]


def _qsmih_loss_ref(u, y, config):
    """Pure-JAX reference for correctness checking (highest-precision matmuls)."""
    hp = lax.Precision.HIGHEST
    u = u.astype(jnp.float32)
    y = y.astype(jnp.float32)
    u = u / (jnp.sqrt(jnp.sum(u ** 2, axis=1, keepdims=True)) + 1e-8)
    Y = 0.5 * (jnp.dot(u, u.T, precision=hp) + 1.0)
    D = (jnp.dot(y, y.T, precision=hp) > 0).astype(jnp.float32)
    M = D.shape[1] ** 2 / jnp.sum(D)
    if config["use_square_clamp"]:
        L = (D * Y - 1.0) ** 2 + (1.0 / M) * Y ** 2
    else:
        L = (1.0 / M) * Y - D * Y
    return jnp.mean(L) + config["alpha"] * jnp.mean(jnp.abs(jnp.abs(u) - 1.0))


if __name__ == "__main__":
    # Small synthetic problem: N samples, `bit`-wide hash codes, C classes.
    N, BIT, C = 256, 32, 4
    key = jax.random.PRNGKey(0)
    ku, kl = jax.random.split(key)

    u = jax.random.normal(ku, (N, BIT), dtype=jnp.float32)
    labels = jax.random.randint(kl, (N,), 0, C)
    y = jax.nn.one_hot(labels, C, dtype=jnp.float32)   # (N, C) one-hot labels
    ind = jnp.arange(N)                                 # unused, mirrors API

    # Square-clamp branch, one-hot fast path, auto strip size.
    cfg1 = {"use_square_clamp": True, "alpha": 0.1}
    loss1 = qsmih_loss(u, y, ind, cfg1)
    jax.block_until_ready(loss1)
    ref1 = _qsmih_loss_ref(u, y, cfg1)
    assert jnp.allclose(loss1, ref1, atol=1e-4, rtol=1e-4), (loss1, ref1)

    # Non-clamp branch, 4-step strip reduction.
    cfg2 = {"use_square_clamp": False, "alpha": 0.1}
    loss2 = qsmih_loss(u, y, ind, cfg2, tm=64)
    jax.block_until_ready(loss2)
    ref2 = _qsmih_loss_ref(u, y, cfg2)
    assert jnp.allclose(loss2, ref2, atol=1e-4, rtol=1e-4), (loss2, ref2)

    # Exact multi-hot fallback path (label Gram in-kernel), 2-step reduction.
    loss3 = qsmih_loss(u, y, ind, cfg1, tm=128, labels_one_hot=False)
    jax.block_until_ready(loss3)
    assert jnp.allclose(loss3, ref1, atol=1e-4, rtol=1e-4), (loss3, ref1)

    print("KERNEL_OK")
</pallas_src>

<mosaic_0001>
module attributes {stable_mosaic.version = 11 : i64} {
  func.func @kernel(%arg0: i32, %arg1: memref<1xf32, #tpu.memory_space<smem>>, %arg2: memref<256x32xf32, #tpu.memory_space<vmem>>, %arg3: memref<256x1xf32, #tpu.memory_space<vmem>>, %arg4: memref<1x256xf32, #tpu.memory_space<vmem>>, %arg5: memref<1x1xf32, #tpu.memory_space<smem>>, %arg6: memref<256x32xf32, #tpu.memory_space<vmem>>, %arg7: memref<1x256xf32, #tpu.memory_space<vmem>>, %arg8: memref<1xf32, #tpu.memory_space<smem>>) attributes {dimension_semantics = [#tpu.dimension_semantics<arbitrary>], iteration_bounds = array<i64: 1>, scalar_prefetch = 0 : i64, scratch_operands = 3 : i64, tpu.core_type = #tpu.core_type<tc>, window_params = [{transform_indices = @transform_0, window_bounds = array<i64: 1>}, {pipeline_mode = #tpu.pipeline_mode<synchronous>, transform_indices = @transform_1, window_bounds = array<i64: 256, 32>}, {pipeline_mode = #tpu.pipeline_mode<synchronous>, transform_indices = @transform_2, window_bounds = array<i64: 256, 1>}, {pipeline_mode = #tpu.pipeline_mode<synchronous>, transform_indices = @transform_3, window_bounds = array<i64: 1, 256>}, {transform_indices = @transform_4, window_bounds = array<i64: 1, 1>}]} {
    %c0_i32 = arith.constant 0 : i32
    %0 = arith.cmpi eq, %arg0, %c0_i32 : i32
    %1 = arith.extui %0 : i1 to i32
    %c0_i32_0 = arith.constant 0 : i32
    %2 = arith.cmpi ne, %1, %c0_i32_0 : i32
    scf.if %2 {
      %c0_18 = arith.constant 0 : index
      %c0_19 = arith.constant 0 : index
      %37 = vector.load %arg2[%c0_18, %c0_19] : memref<256x32xf32, #tpu.memory_space<vmem>>, vector<256x32xf32>
      %38 = arith.mulf %37, %37 : vector<256x32xf32>
      %cst_20 = arith.constant dense<0.000000e+00> : vector<256xf32>
      %39 = vector.multi_reduction <add>, %38, %cst_20 [1] : vector<256x32xf32> to vector<256xf32>
      %40 = vector.shape_cast %39 : vector<256xf32> to vector<256x1xf32>
      %41 = math.sqrt %40 : vector<256x1xf32>
      %cst_21 = arith.constant 9.99999993E-9 : f32
      %42 = vector.broadcast %cst_21 : f32 to vector<256x1xf32>
      %43 = arith.addf %41, %42 : vector<256x1xf32>
      %44 = tpu.reciprocal %43 : vector<256x1xf32> -> vector<256x1xf32>
      %45 = vector.broadcast %44 : vector<256x1xf32> to vector<256x32xf32>
      %46 = arith.mulf %37, %45 : vector<256x32xf32>
      %c0_22 = arith.constant 0 : index
      %c0_23 = arith.constant 0 : index
      %47 = vector.load %arg6[%c0_22, %c0_23] : memref<256x32xf32, #tpu.memory_space<vmem>>, vector<256x32xf32>
      tpu.vector_store %arg6[%c0_22, %c0_23], %46 {strides = array<i32>} : memref<256x32xf32, #tpu.memory_space<vmem>>, vector<256x32xf32>,
      %cst_24 = arith.constant 0.000000e+00 : f32
      %48 = vector.broadcast %cst_24 : f32 to vector<1x256xf32>
      %c0_25 = arith.constant 0 : index
      %c0_26 = arith.constant 0 : index
      %49 = vector.load %arg7[%c0_25, %c0_26] : memref<1x256xf32, #tpu.memory_space<vmem>>, vector<1x256xf32>
      tpu.vector_store %arg7[%c0_25, %c0_26], %48 {strides = array<i32>} : memref<1x256xf32, #tpu.memory_space<vmem>>, vector<1x256xf32>,
      %50 = math.absf %46 : vector<256x32xf32>
      %cst_27 = arith.constant 1.000000e+00 : f32
      %51 = vector.broadcast %cst_27 : f32 to vector<256x32xf32>
      %52 = arith.subf %50, %51 : vector<256x32xf32>
      %53 = math.absf %52 : vector<256x32xf32>
      %54 = vector.shape_cast %53 : vector<256x32xf32> to vector<1x256x32xf32>
      %cst_28 = arith.constant dense<0.000000e+00> : vector<1xf32>
      %55 = vector.multi_reduction <add>, %54, %cst_28 [1, 2] : vector<1x256x32xf32> to vector<1xf32>
      %56 = vector.shape_cast %55 : vector<1xf32> to vector<1x1x1xf32>
      %57 = vector.extract %56[0, 0, 0] : f32 from vector<1x1x1xf32>
      %c0_29 = arith.constant 0 : index
      %58 = memref.load %arg8[%c0_29] : memref<1xf32, #tpu.memory_space<smem>>
      memref.store %57, %arg8[%c0_29] : memref<1xf32, #tpu.memory_space<smem>>
    } else {
    }
    %c256_i32 = arith.constant 256 : i32
    %3 = arith.muli %arg0, %c256_i32 : i32
    %4 = tpu.assume_multiple %3, 256 : i32
    %5 = arith.index_cast %4 : i32 to index
    %c0 = arith.constant 0 : index
    %6 = vector.load %arg6[%5, %c0] : memref<256x32xf32, #tpu.memory_space<vmem>>, vector<256x32xf32>
    %c0_1 = arith.constant 0 : index
    %c0_2 = arith.constant 0 : index
    %7 = vector.load %arg6[%c0_1, %c0_2] : memref<256x32xf32, #tpu.memory_space<vmem>>, vector<256x32xf32>
    %cst = arith.constant dense<0.000000e+00> : vector<256x256xf32>
    %8 = tpu.matmul %6, %7, %cst {dimension_numbers = #tpu.dot_dimension_numbers<[1], [1], [0], [0], [0, 0, 1, 0], [], []>} : vector<256x32xf32>, vector<256x32xf32>, vector<256x256xf32> -> vector<256x256xf32>
    %cst_3 = arith.constant 1.000000e+00 : f32
    %9 = vector.broadcast %cst_3 : f32 to vector<256x256xf32>
    %10 = arith.addf %8, %9 : vector<256x256xf32>
    %cst_4 = arith.constant 5.000000e-01 : f32
    %11 = vector.broadcast %cst_4 : f32 to vector<256x256xf32>
    %12 = arith.mulf %11, %10 : vector<256x256xf32>
    %13 = arith.index_cast %4 : i32 to index
    %c0_5 = arith.constant 0 : index
    %14 = vector.load %arg3[%13, %c0_5] : memref<256x1xf32, #tpu.memory_space<vmem>>, vector<256x1xf32>
    %c0_6 = arith.constant 0 : index
    %c0_7 = arith.constant 0 : index
    %15 = vector.load %arg4[%c0_6, %c0_7] : memref<1x256xf32, #tpu.memory_space<vmem>>, vector<1x256xf32>
    %16 = vector.broadcast %14 : vector<256x1xf32> to vector<256x256xf32>
    %17 = vector.broadcast %15 : vector<1x256xf32> to vector<256x256xf32>
    %18 = arith.cmpf oeq, %16, %17 : vector<256x256xf32>
    %c0_8 = arith.constant 0 : index
    %19 = memref.load %arg1[%c0_8] : memref<1xf32, #tpu.memory_space<smem>>
    %cst_9 = arith.constant 1.000000e+00 : f32
    %20 = vector.broadcast %cst_9 : f32 to vector<256x256xf32>
    %21 = arith.subf %12, %20 : vector<256x256xf32>
    %22 = arith.mulf %21, %21 : vector<256x256xf32>
    %cst_10 = arith.constant 1.000000e+00 : f32
    %23 = vector.broadcast %cst_10 : f32 to vector<256x256xf32>
    %24 = arith.select %18, %22, %23 : vector<256x256xi1>, vector<256x256xf32>
    %25 = arith.mulf %12, %12 : vector<256x256xf32>
    %26 = vector.broadcast %19 : f32 to vector<256x256xf32>
    %27 = arith.mulf %26, %25 : vector<256x256xf32>
    %28 = arith.addf %24, %27 : vector<256x256xf32>
    %c0_11 = arith.constant 0 : index
    %c0_12 = arith.constant 0 : index
    %29 = vector.load %arg7[%c0_11, %c0_12] : memref<1x256xf32, #tpu.memory_space<vmem>>, vector<1x256xf32>
    %cst_13 = arith.constant dense<0.000000e+00> : vector<256xf32>
    %30 = vector.multi_reduction <add>, %28, %cst_13 [0] : vector<256x256xf32> to vector<256xf32>
    %31 = vector.shape_cast %30 : vector<256xf32> to vector<1x256xf32>
    %32 = arith.addf %29, %31 : vector<1x256xf32>
    %c0_14 = arith.constant 0 : index
    %c0_15 = arith.constant 0 : index
    %33 = vector.load %arg7[%c0_14, %c0_15] : memref<1x256xf32, #tpu.memory_space<vmem>>, vector<1x256xf32>
    tpu.vector_store %arg7[%c0_14, %c0_15], %32 {strides = array<i32>} : memref<1x256xf32, #tpu.memory_space<vmem>>, vector<1x256xf32>,
    %c0_i32_16 = arith.constant 0 : i32
    %34 = arith.cmpi eq, %arg0, %c0_i32_16 : i32
    %35 = arith.extui %34 : i1 to i32
    %c0_i32_17 = arith.constant 0 : i32
    %36 = arith.cmpi ne, %35, %c0_i32_17 : i32
    scf.if %36 {
      %c0_18 = arith.constant 0 : index
      %c0_19 = arith.constant 0 : index
      %37 = vector.load %arg7[%c0_18, %c0_19] : memref<1x256xf32, #tpu.memory_space<vmem>>, vector<1x256xf32>
      %38 = vector.shape_cast %37 : vector<1x256xf32> to vector<1x1x256xf32>
      %cst_20 = arith.constant dense<0.000000e+00> : vector<1xf32>
      %39 = vector.multi_reduction <add>, %38, %cst_20 [1, 2] : vector<1x1x256xf32> to vector<1xf32>
      %40 = vector.shape_cast %39 : vector<1xf32> to vector<1x1x1xf32>
      %41 = vector.extract %40[0, 0, 0] : f32 from vector<1x1x1xf32>
      %cst_21 = arith.constant 1.52587891E-5 : f32
      %42 = arith.mulf %41, %cst_21 : f32
      %c0_22 = arith.constant 0 : index
      %43 = memref.load %arg8[%c0_22] : memref<1xf32, #tpu.memory_space<smem>>
      %cst_23 = arith.constant 1.000000e-01 : f32
      %44 = arith.mulf %cst_23, %43 : f32
      %cst_24 = arith.constant 1.22070313E-4 : f32
      %45 = arith.mulf %44, %cst_24 : f32
      %46 = arith.addf %42, %45 : f32
      %c0_25 = arith.constant 0 : index
      %c0_26 = arith.constant 0 : index
      %47 = memref.load %arg5[%c0_25, %c0_26] : memref<1x1xf32, #tpu.memory_space<smem>>
      memref.store %46, %arg5[%c0_25, %c0_26] : memref<1x1xf32, #tpu.memory_space<smem>>
    } else {
    }
    return
  }
  func.func @transform_0(%arg0: i32) -> i32 {
    %c0_i32 = arith.constant 0 : i32
    %c0_i32_0 = arith.constant 0 : i32
    return %c0_i32 : i32
  }
  func.func @transform_1(%arg0: i32) -> (i32, i32) {
    %c0_i32 = arith.constant 0 : i32
    %c0_i32_0 = arith.constant 0 : i32
    %c0_i32_1 = arith.constant 0 : i32
    return %c0_i32, %c0_i32_0 : i32, i32
  }
  func.func @transform_2(%arg0: i32) -> (i32, i32) {
    %c0_i32 = arith.constant 0 : i32
    %c0_i32_0 = arith.constant 0 : i32
    %c0_i32_1 = arith.constant 0 : i32
    return %c0_i32, %c0_i32_0 : i32, i32
  }
  func.func @transform_3(%arg0: i32) -> (i32, i32) {
    %c0_i32 = arith.constant 0 : i32
    %c0_i32_0 = arith.constant 0 : i32
    %c0_i32_1 = arith.constant 0 : i32
    return %c0_i32, %c0_i32_0 : i32, i32
  }
  func.func @transform_4(%arg0: i32) -> (i32, i32) {
    %c0_i32 = arith.constant 0 : i32
    %c0_i32_0 = arith.constant 0 : i32
    %c0_i32_1 = arith.constant 0 : i32
    return %c0_i32, %c0_i32_0 : i32, i32
  }
}

</mosaic_0001>

<llo_original>
// kernel: tpu_custom_call.1
$region0: #{tpu_custom_call.1}
  #allocation0 [shape = 'u32[]', space=smem, size = 0x4, offset = 0x4, fixed_abs, tag = 'smem constant byte address 0x4 - core index']
  #allocation1 [shape = 'u32[144,128]{1,0:T(1,128)}', space=vmem, size = 0x12000, scoped, tag = 'internal scratch']
  #allocation2 [shape = 'f32[256,32]{1,0:T(8,128)}', space=vmem, size = 0x20000, scoped, tag = 'scratch operand']
  #allocation3 [shape = 'f32[1,256]{1,0:T(1,128)}', space=vmem, size = 0x400, scoped, tag = 'scratch operand']
  #allocation4 [shape = 'f32[1]{0:T(128)}', space=smem, size = 0x200, scoped, tag = 'scratch operand']
  #allocation5 [shape = 'f32[1]{0:T(128)S(6)}', space=smem, size = 0x200, scoped, tag = 'scoped memory for tpu_custom_call.1']
  %s0 = inlined_call_operand.<no memory space> [shape: f32[1], index: 0, kind: input, shape index: {}]
  %s1 = inlined_call_operand.vmem [shape: f32[256,32], index: 1, kind: input, shape index: {}]
  %s2 = inlined_call_operand.vmem [shape: f32[256,1], index: 2, kind: input, shape index: {}]
  %s3 = inlined_call_operand.vmem [shape: f32[1,256], index: 3, kind: input, shape index: {}]
  %s4 = inlined_call_operand.hbm [shape: f32[1,1], index: 4, kind: output, shape index: {}]
  %s5 = sld [smem:[#allocation0]]
  $region34: #{tpu_custom_call.1} parent=0
    _
  %s7 = ssub.s32 1, %s5
  %s8 = scalar_select 0, %s7, %s5
  %9 = sst [smem:[#allocation5]] %s0
  $region1: #{tpu_custom_call.1} parent=0
    #allocation6 [shape = 'u8[512]{0}', space=smem, size = 0x200, scoped, tag = 'output window, operand 0, single buffered']
    #allocation7 [shape = 's32[1]{0}', space=sflag, size = 0x4, scoped, tag = 'scoped memory for tpu_custom_call.1']
    %10 = vsyncpa [#allocation7], 0
    // Predicated region
    $region2: #{tpu_custom_call.1} parent=1 // pred_check
      _
    $region3: #{tpu_custom_call.1} parent=1 // pred_check_branch
      %12 = sbr.rel (0) target = $region5
    $region4: #{tpu_custom_call.1} parent=1 // pred_region
      _
    $region5: #{tpu_custom_call.1} parent=1 // pred_fallthru
      _
    // Predicated region
    $region6: #{tpu_custom_call.1} parent=1 // pred_check
      _
    $region7: #{tpu_custom_call.1} parent=1 // pred_check_branch
      %14 = sbr.rel (0) target = $region9
    $region8: #{tpu_custom_call.1} parent=1 // pred_region
      _
    $region9: #{tpu_custom_call.1} parent=1 // pred_fallthru
      _
    // Predicated region
    $region10: #{tpu_custom_call.1} parent=1 // pred_check
      _
    $region11: #{tpu_custom_call.1} parent=1 // pred_check_branch
      %16 = sbr.rel (0) target = $region13
    $region12: #{tpu_custom_call.1} parent=1 // pred_region
      _
    $region13: #{tpu_custom_call.1} parent=1 // pred_fallthru
      _
    // Predicated region
    $region14: #{tpu_custom_call.1} parent=1 // pred_check
      _
    $region15: #{tpu_custom_call.1} parent=1 // pred_check_branch
      %18 = sbr.rel (0) target = $region17
    $region16: #{tpu_custom_call.1} parent=1 // pred_region
      _
    $region17: #{tpu_custom_call.1} parent=1 // pred_fallthru
      _
    %p19 = scmp.eq.s32.totalorder 0, 0
    // Predicated region
    $region18: #{tpu_custom_call.1} parent=1 // pred_check
      %p20 = pneg %p19
    $region19: #{tpu_custom_call.1} parent=1 // pred_check_branch
      %22 = sbr.rel (%p20) target = $region21
    $region20: #{tpu_custom_call.1} parent=1 // pred_region
      %v23 = vld [vmem:[%s1] sm:$0xff]
      %v24 = vld [vmem:[%s1 + $0x8] sm:$0xff]
      %v25 = vld [vmem:[%s1 + $0x10] sm:$0xff]
      %v26 = vld [vmem:[%s1 + $0x18] sm:$0xff]
      %v27 = vld [vmem:[%s1 + $0x20] sm:$0xff]
      %v28 = vld [vmem:[%s1 + $0x28] sm:$0xff]
      %v29 = vld [vmem:[%s1 + $0x30] sm:$0xff]
      %v30 = vld [vmem:[%s1 + $0x38] sm:$0xff]
      %v31 = vld [vmem:[%s1 + $0x40] sm:$0xff]
      %v32 = vld [vmem:[%s1 + $0x48] sm:$0xff]
      %v33 = vld [vmem:[%s1 + $0x50] sm:$0xff]
      %v34 = vld [vmem:[%s1 + $0x58] sm:$0xff]
      %v35 = vld [vmem:[%s1 + $0x60] sm:$0xff]
      %v36 = vld [vmem:[%s1 + $0x68] sm:$0xff]
      %v37 = vld [vmem:[%s1 + $0x70] sm:$0xff]
      %v38 = vld [vmem:[%s1 + $0x78] sm:$0xff]
      %v39 = vld [vmem:[%s1 + $0x80] sm:$0xff]
      %v40 = vld [vmem:[%s1 + $0x88] sm:$0xff]
      %v41 = vld [vmem:[%s1 + $0x90] sm:$0xff]
      %v42 = vld [vmem:[%s1 + $0x98] sm:$0xff]
      %v43 = vld [vmem:[%s1 + $0xa0] sm:$0xff]
      %v44 = vld [vmem:[%s1 + $0xa8] sm:$0xff]
      %v45 = vld [vmem:[%s1 + $0xb0] sm:$0xff]
      %v46 = vld [vmem:[%s1 + $0xb8] sm:$0xff]
      %v47 = vld [vmem:[%s1 + $0xc0] sm:$0xff]
      %v48 = vld [vmem:[%s1 + $0xc8] sm:$0xff]
      %v49 = vld [vmem:[%s1 + $0xd0] sm:$0xff]
      %v50 = vld [vmem:[%s1 + $0xd8] sm:$0xff]
      %v51 = vld [vmem:[%s1 + $0xe0] sm:$0xff]
      %v52 = vld [vmem:[%s1 + $0xe8] sm:$0xff]
      %v53 = vld [vmem:[%s1 + $0xf0] sm:$0xff]
      %v54 = vld [vmem:[%s1 + $0xf8] sm:$0xff]
      %v55 = vmul.f32 %v23, %v23
      %v56 = vmul.f32 %v24, %v24
      %v57 = vmul.f32 %v25, %v25
      %v58 = vmul.f32 %v26, %v26
      %v59 = vmul.f32 %v27, %v27
      %v60 = vmul.f32 %v28, %v28
      %v61 = vmul.f32 %v29, %v29
      %v62 = vmul.f32 %v30, %v30
      %v63 = vmul.f32 %v31, %v31
      %v64 = vmul.f32 %v32, %v32
      %v65 = vmul.f32 %v33, %v33
      %v66 = vmul.f32 %v34, %v34
      %v67 = vmul.f32 %v35, %v35
      %v68 = vmul.f32 %v36, %v36
      %v69 = vmul.f32 %v37, %v37
      %v70 = vmul.f32 %v38, %v38
      %v71 = vmul.f32 %v39, %v39
      %v72 = vmul.f32 %v40, %v40
      %v73 = vmul.f32 %v41, %v41
      %v74 = vmul.f32 %v42, %v42
      %v75 = vmul.f32 %v43, %v43
      %v76 = vmul.f32 %v44, %v44
      %v77 = vmul.f32 %v45, %v45
      %v78 = vmul.f32 %v46, %v46
      %v79 = vmul.f32 %v47, %v47
      %v80 = vmul.f32 %v48, %v48
      %v81 = vmul.f32 %v49, %v49
      %v82 = vmul.f32 %v50, %v50
      %v83 = vmul.f32 %v51, %v51
      %v84 = vmul.f32 %v52, %v52
      %v85 = vmul.f32 %v53, %v53
      %v86 = vmul.f32 %v54, %v54
      %vm87 = vcmask 261120
      %v88 = vsel %vm87, %v55, 0.0
      %89 = vadd.xlane.f32.xlu0 %v88
      %v90 = vpop.xlane.xlu0 %89
      %v91 = vsel %vm87, %v56, 0.0
      %92 = vadd.xlane.f32.xlu0 %v91
      %v93 = vpop.xlane.xlu0 %92
      %v94 = vsel %vm87, %v57, 0.0
      %95 = vadd.xlane.f32.xlu0 %v94
      %v96 = vpop.xlane.xlu0 %95
      %v97 = vsel %vm87, %v58, 0.0
      %98 = vadd.xlane.f32.xlu0 %v97
      %v99 = vpop.xlane.xlu0 %98
      %v100 = vsel %vm87, %v59, 0.0
      %101 = vadd.xlane.f32.xlu0 %v100
      %v102 = vpop.xlane.xlu0 %101
      %v103 = vsel %vm87, %v60, 0.0
      %104 = vadd.xlane.f32.xlu0 %v103
      %v105 = vpop.xlane.xlu0 %104
      %v106 = vsel %vm87, %v61, 0.0
      %107 = vadd.xlane.f32.xlu0 %v106
      %v108 = vpop.xlane.xlu0 %107
      %v109 = vsel %vm87, %v62, 0.0
      %110 = vadd.xlane.f32.xlu0 %v109
      %v111 = vpop.xlane.xlu0 %110
      %v112 = vsel %vm87, %v63, 0.0
      %113 = vadd.xlane.f32.xlu0 %v112
      %v114 = vpop.xlane.xlu0 %113
      %v115 = vsel %vm87, %v64, 0.0
      %116 = vadd.xlane.f32.xlu0 %v115
      %v117 = vpop.xlane.xlu0 %116
      %v118 = vsel %vm87, %v65, 0.0
      %119 = vadd.xlane.f32.xlu0 %v118
      %v120 = vpop.xlane.xlu0 %119
      %v121 = vsel %vm87, %v66, 0.0
      %122 = vadd.xlane.f32.xlu0 %v121
      %v123 = vpop.xlane.xlu0 %122
      %v124 = vsel %vm87, %v67, 0.0
      %125 = vadd.xlane.f32.xlu0 %v124
      %v126 = vpop.xlane.xlu0 %125
      %v127 = vsel %vm87, %v68, 0.0
      %128 = vadd.xlane.f32.xlu0 %v127
      %v129 = vpop.xlane.xlu0 %128
      %v130 = vsel %vm87, %v69, 0.0
      %131 = vadd.xlane.f32.xlu0 %v130
      %v132 = vpop.xlane.xlu0 %131
      %v133 = vsel %vm87, %v70, 0.0
      %134 = vadd.xlane.f32.xlu0 %v133
      %v135 = vpop.xlane.xlu0 %134
      %v136 = vsel %vm87, %v71, 0.0
      %137 = vadd.xlane.f32.xlu0 %v136
      %v138 = vpop.xlane.xlu0 %137
      %v139 = vsel %vm87, %v72, 0.0
      %140 = vadd.xlane.f32.xlu0 %v139
      %v141 = vpop.xlane.xlu0 %140
      %v142 = vsel %vm87, %v73, 0.0
      %143 = vadd.xlane.f32.xlu0 %v142
      %v144 = vpop.xlane.xlu0 %143
      %v145 = vsel %vm87, %v74, 0.0
      %146 = vadd.xlane.f32.xlu0 %v145
      %v147 = vpop.xlane.xlu0 %146
      %v148 = vsel %vm87, %v75, 0.0
      %149 = vadd.xlane.f32.xlu0 %v148
      %v150 = vpop.xlane.xlu0 %149
      %v151 = vsel %vm87, %v76, 0.0
      %152 = vadd.xlane.f32.xlu0 %v151
      %v153 = vpop.xlane.xlu0 %152
      %v154 = vsel %vm87, %v77, 0.0
      %155 = vadd.xlane.f32.xlu0 %v154
      %v156 = vpop.xlane.xlu0 %155
      %v157 = vsel %vm87, %v78, 0.0
      %158 = vadd.xlane.f32.xlu0 %v157
      %v159 = vpop.xlane.xlu0 %158
      %v160 = vsel %vm87, %v79, 0.0
      %161 = vadd.xlane.f32.xlu0 %v160
      %v162 = vpop.xlane.xlu0 %161
      %v163 = vsel %vm87, %v80, 0.0
      %164 = vadd.xlane.f32.xlu0 %v163
      %v165 = vpop.xlane.xlu0 %164
      %v166 = vsel %vm87, %v81, 0.0
      %167 = vadd.xlane.f32.xlu0 %v166
      %v168 = vpop.xlane.xlu0 %167
      %v169 = vsel %vm87, %v82, 0.0
      %170 = vadd.xlane.f32.xlu0 %v169
      %v171 = vpop.xlane.xlu0 %170
      %v172 = vsel %vm87, %v83, 0.0
      %173 = vadd.xlane.f32.xlu0 %v172
      %v174 = vpop.xlane.xlu0 %173
      %v175 = vsel %vm87, %v84, 0.0
      %176 = vadd.xlane.f32.xlu0 %v175
      %v177 = vpop.xlane.xlu0 %176
      %v178 = vsel %vm87, %v85, 0.0
      %179 = vadd.xlane.f32.xlu0 %v178
      %v180 = vpop.xlane.xlu0 %179
      %v181 = vsel %vm87, %v86, 0.0
      %182 = vadd.xlane.f32.xlu0 %v181
      %v183 = vpop.xlane.xlu0 %182
      %v184 = vrsqrt.pop %v90
      %v185 = vmul.f32 %v90, %v184
      %vm186 = vcmp.eq.f32.partialorder %v90, inf
      %v187 = vsel %vm186, %v90, %v185
      %vm188 = vcmp.eq.f32.partialorder %v90, 0.0
      %v189 = vand.u32 %v90, 2147483648
      %v190 = vsel %vm188, %v189, %v187
      %v191 = vrsqrt.pop %v93
      %v192 = vmul.f32 %v93, %v191
      %vm193 = vcmp.eq.f32.partialorder %v93, inf
      %v194 = vsel %vm193, %v93, %v192
      %vm195 = vcmp.eq.f32.partialorder %v93, 0.0
      %v196 = vand.u32 %v93, 2147483648
      %v197 = vsel %vm195, %v196, %v194
      %v198 = vrsqrt.pop %v96
      %v199 = vmul.f32 %v96, %v198
      %vm200 = vcmp.eq.f32.partialorder %v96, inf
      %v201 = vsel %vm200, %v96, %v199
      %vm202 = vcmp.eq.f32.partialorder %v96, 0.0
      %v203 = vand.u32 %v96, 2147483648
      %v204 = vsel %vm202, %v203, %v201
      %v205 = vrsqrt.pop %v99
      %v206 = vmul.f32 %v99, %v205
      %vm207 = vcmp.eq.f32.partialorder %v99, inf
      %v208 = vsel %vm207, %v99, %v206
      %vm209 = vcmp.eq.f32.partialorder %v99, 0.0
      %v210 = vand.u32 %v99, 2147483648
      %v211 = vsel %vm209, %v210, %v208
      %v212 = vrsqrt.pop %v102
      %v213 = vmul.f32 %v102, %v212
      %vm214 = vcmp.eq.f32.partialorder %v102, inf
      %v215 = vsel %vm214, %v102, %v213
      %vm216 = vcmp.eq.f32.partialorder %v102, 0.0
      %v217 = vand.u32 %v102, 2147483648
      %v218 = vsel %vm216, %v217, %v215
      %v219 = vrsqrt.pop %v105
      %v220 = vmul.f32 %v105, %v219
      %vm221 = vcmp.eq.f32.partialorder %v105, inf
      %v222 = vsel %vm221, %v105, %v220
      %vm223 = vcmp.eq.f32.partialorder %v105, 0.0
      %v224 = vand.u32 %v105, 2147483648
      %v225 = vsel %vm223, %v224, %v222
      %v226 = vrsqrt.pop %v108
      %v227 = vmul.f32 %v108, %v226
      %vm228 = vcmp.eq.f32.partialorder %v108, inf
      %v229 = vsel %vm228, %v108, %v227
      %vm230 = vcmp.eq.f32.partialorder %v108, 0.0
      %v231 = vand.u32 %v108, 2147483648
      %v232 = vsel %vm230, %v231, %v229
      %v233 = vrsqrt.pop %v111
      %v234 = vmul.f32 %v111, %v233
      %vm235 = vcmp.eq.f32.partialorder %v111, inf
      %v236 = vsel %vm235, %v111, %v234
      %vm237 = vcmp.eq.f32.partialorder %v111, 0.0
      %v238 = vand.u32 %v111, 2147483648
      %v239 = vsel %vm237, %v238, %v236
      %v240 = vrsqrt.pop %v114
      %v241 = vmul.f32 %v114, %v240
      %vm242 = vcmp.eq.f32.partialorder %v114, inf
      %v243 = vsel %vm242, %v114, %v241
      %vm244 = vcmp.eq.f32.partialorder %v114, 0.0
      %v245 = vand.u32 %v114, 2147483648
      %v246 = vsel %vm244, %v245, %v243
      %v247 = vrsqrt.pop %v117
      %v248 = vmul.f32 %v117, %v247
      %vm249 = vcmp.eq.f32.partialorder %v117, inf
      %v250 = vsel %vm249, %v117, %v248
      %vm251 = vcmp.eq.f32.partialorder %v117, 0.0
      %v252 = vand.u32 %v117, 2147483648
      %v253 = vsel %vm251, %v252, %v250
      %v254 = vrsqrt.pop %v120
      %v255 = vmul.f32 %v120, %v254
      %vm256 = vcmp.eq.f32.partialorder %v120, inf
      %v257 = vsel %vm256, %v120, %v255
      %vm258 = vcmp.eq.f32.partialorder %v120, 0.0
      %v259 = vand.u32 %v120, 2147483648
      %v260 = vsel %vm258, %v259, %v257
      %v261 = vrsqrt.pop %v123
      %v262 = vmul.f32 %v123, %v261
      %vm263 = vcmp.eq.f32.partialorder %v123, inf
      %v264 = vsel %vm263, %v123, %v262
      %vm265 = vcmp.eq.f32.partialorder %v123, 0.0
      %v266 = vand.u32 %v123, 2147483648
      %v267 = vsel %vm265, %v266, %v264
      %v268 = vrsqrt.pop %v126
      %v269 = vmul.f32 %v126, %v268
      %vm270 = vcmp.eq.f32.partialorder %v126, inf
      %v271 = vsel %vm270, %v126, %v269
      %vm272 = vcmp.eq.f32.partialorder %v126, 0.0
      %v273 = vand.u32 %v126, 2147483648
      %v274 = vsel %vm272, %v273, %v271
      %v275 = vrsqrt.pop %v129
      %v276 = vmul.f32 %v129, %v275
      %vm277 = vcmp.eq.f32.partialorder %v129, inf
      %v278 = vsel %vm277, %v129, %v276
      %vm279 = vcmp.eq.f32.partialorder %v129, 0.0
      %v280 = vand.u32 %v129, 2147483648
      %v281 = vsel %vm279, %v280, %v278
      %v282 = vrsqrt.pop %v132
      %v283 = vmul.f32 %v132, %v282
      %vm284 = vcmp.eq.f32.partialorder %v132, inf
      %v285 = vsel %vm284, %v132, %v283
      %vm286 = vcmp.eq.f32.partialorder %v132, 0.0
      %v287 = vand.u32 %v132, 2147483648
      %v288 = vsel %vm286, %v287, %v285
      %v289 = vrsqrt.pop %v135
      %v290 = vmul.f32 %v135, %v289
      %vm291 = vcmp.eq.f32.partialorder %v135, inf
      %v292 = vsel %vm291, %v135, %v290
      %vm293 = vcmp.eq.f32.partialorder %v135, 0.0
      %v294 = vand.u32 %v135, 2147483648
      %v295 = vsel %vm293, %v294, %v292
      %v296 = vrsqrt.pop %v138
      %v297 = vmul.f32 %v138, %v296
      %vm298 = vcmp.eq.f32.partialorder %v138, inf
      %v299 = vsel %vm298, %v138, %v297
      %vm300 = vcmp.eq.f32.partialorder %v138, 0.0
      %v301 = vand.u32 %v138, 2147483648
      %v302 = vsel %vm300, %v301, %v299
      %v303 = vrsqrt.pop %v141
      %v304 = vmul.f32 %v141, %v303
      %vm305 = vcmp.eq.f32.partialorder %v141, inf
      %v306 = vsel %vm305, %v141, %v304
      %vm307 = vcmp.eq.f32.partialorder %v141, 0.0
      %v308 = vand.u32 %v141, 2147483648
      %v309 = vsel %vm307, %v308, %v306
      %v310 = vrsqrt.pop %v144
      %v311 = vmul.f32 %v144, %v310
      %vm312 = vcmp.eq.f32.partialorder %v144, inf
      %v313 = vsel %vm312, %v144, %v311
      %vm314 = vcmp.eq.f32.partialorder %v144, 0.0
      %v315 = vand.u32 %v144, 2147483648
      %v316 = vsel %vm314, %v315, %v313
      %v317 = vrsqrt.pop %v147
      %v318 = vmul.f32 %v147, %v317
      %vm319 = vcmp.eq.f32.partialorder %v147, inf
      %v320 = vsel %vm319, %v147, %v318
      %vm321 = vcmp.eq.f32.partialorder %v147, 0.0
      %v322 = vand.u32 %v147, 2147483648
      %v323 = vsel %vm321, %v322, %v320
      %v324 = vrsqrt.pop %v150
      %v325 = vmul.f32 %v150, %v324
      %vm326 = vcmp.eq.f32.partialorder %v150, inf
      %v327 = vsel %vm326, %v150, %v325
      %vm328 = vcmp.eq.f32.partialorder %v150, 0.0
      %v329 = vand.u32 %v150, 2147483648
      %v330 = vsel %vm328, %v329, %v327
      %v331 = vrsqrt.pop %v153
      %v332 = vmul.f32 %v153, %v331
      %vm333 = vcmp.eq.f32.partialorder %v153, inf
      %v334 = vsel %vm333, %v153, %v332
      %vm335 = vcmp.eq.f32.partialorder %v153, 0.0
      %v336 = vand.u32 %v153, 2147483648
      %v337 = vsel %vm335, %v336, %v334
      %v338 = vrsqrt.pop %v156
      %v339 = vmul.f32 %v156, %v338
      %vm340 = vcmp.eq.f32.partialorder %v156, inf
      %v341 = vsel %vm340, %v156, %v339
      %vm342 = vcmp.eq.f32.partialorder %v156, 0.0
      %v343 = vand.u32 %v156, 2147483648
      %v344 = vsel %vm342, %v343, %v341
      %v345 = vrsqrt.pop %v159
      %v346 = vmul.f32 %v159, %v345
      %vm347 = vcmp.eq.f32.partialorder %v159, inf
      %v348 = vsel %vm347, %v159, %v346
      %vm349 = vcmp.eq.f32.partialorder %v159, 0.0
      %v350 = vand.u32 %v159, 2147483648
      %v351 = vsel %vm349, %v350, %v348
      %v352 = vrsqrt.pop %v162
      %v353 = vmul.f32 %v162, %v352
      %vm354 = vcmp.eq.f32.partialorder %v162, inf
      %v355 = vsel %vm354, %v162, %v353
      %vm356 = vcmp.eq.f32.partialorder %v162, 0.0
      %v357 = vand.u32 %v162, 2147483648
      %v358 = vsel %vm356, %v357, %v355
      %v359 = vrsqrt.pop %v165
      %v360 = vmul.f32 %v165, %v359
      %vm361 = vcmp.eq.f32.partialorder %v165, inf
      %v362 = vsel %vm361, %v165, %v360
      %vm363 = vcmp.eq.f32.partialorder %v165, 0.0
      %v364 = vand.u32 %v165, 2147483648
      %v365 = vsel %vm363, %v364, %v362
      %v366 = vrsqrt.pop %v168
      %v367 = vmul.f32 %v168, %v366
      %vm368 = vcmp.eq.f32.partialorder %v168, inf
      %v369 = vsel %vm368, %v168, %v367
      %vm370 = vcmp.eq.f32.partialorder %v168, 0.0
      %v371 = vand.u32 %v168, 2147483648
      %v372 = vsel %vm370, %v371, %v369
      %v373 = vrsqrt.pop %v171
      %v374 = vmul.f32 %v171, %v373
      %vm375 = vcmp.eq.f32.partialorder %v171, inf
      %v376 = vsel %vm375, %v171, %v374
      %vm377 = vcmp.eq.f32.partialorder %v171, 0.0
      %v378 = vand.u32 %v171, 2147483648
      %v379 = vsel %vm377, %v378, %v376
      %v380 = vrsqrt.pop %v174
      %v381 = vmul.f32 %v174, %v380
      %vm382 = vcmp.eq.f32.partialorder %v174, inf
      %v383 = vsel %vm382, %v174, %v381
      %vm384 = vcmp.eq.f32.partialorder %v174, 0.0
      %v385 = vand.u32 %v174, 2147483648
      %v386 = vsel %vm384, %v385, %v383
      %v387 = vrsqrt.pop %v177
      %v388 = vmul.f32 %v177, %v387
      %vm389 = vcmp.eq.f32.partialorder %v177, inf
      %v390 = vsel %vm389, %v177, %v388
      %vm391 = vcmp.eq.f32.partialorder %v177, 0.0
      %v392 = vand.u32 %v177, 2147483648
      %v393 = vsel %vm391, %v392, %v390
      %v394 = vrsqrt.pop %v180
      %v395 = vmul.f32 %v180, %v394
      %vm396 = vcmp.eq.f32.partialorder %v180, inf
      %v397 = vsel %vm396, %v180, %v395
      %vm398 = vcmp.eq.f32.partialorder %v180, 0.0
      %v399 = vand.u32 %v180, 2147483648
      %v400 = vsel %vm398, %v399, %v397
      %v401 = vrsqrt.pop %v183
      %v402 = vmul.f32 %v183, %v401
      %vm403 = vcmp.eq.f32.partialorder %v183, inf
      %v404 = vsel %vm403, %v183, %v402
      %vm405 = vcmp.eq.f32.partialorder %v183, 0.0
      %v406 = vand.u32 %v183, 2147483648
      %v407 = vsel %vm405, %v406, %v404
      %v408 = vadd.f32 %v190, 1e-08
      %v409 = vadd.f32 %v197, 1e-08
      %v410 = vadd.f32 %v204, 1e-08
      %v411 = vadd.f32 %v211, 1e-08
      %v412 = vadd.f32 %v218, 1e-08
      %v413 = vadd.f32 %v225, 1e-08
      %v414 = vadd.f32 %v232, 1e-08
      %v415 = vadd.f32 %v239, 1e-08
      %v416 = vadd.f32 %v246, 1e-08
      %v417 = vadd.f32 %v253, 1e-08
      %v418 = vadd.f32 %v260, 1e-08
      %v419 = vadd.f32 %v267, 1e-08
      %v420 = vadd.f32 %v274, 1e-08
      %v421 = vadd.f32 %v281, 1e-08
      %v422 = vadd.f32 %v288, 1e-08
      %v423 = vadd.f32 %v295, 1e-08
      %v424 = vadd.f32 %v302, 1e-08
      %v425 = vadd.f32 %v309, 1e-08
      %v426 = vadd.f32 %v316, 1e-08
      %v427 = vadd.f32 %v323, 1e-08
      %v428 = vadd.f32 %v330, 1e-08
      %v429 = vadd.f32 %v337, 1e-08
      %v430 = vadd.f32 %v344, 1e-08
      %v431 = vadd.f32 %v351, 1e-08
      %v432 = vadd.f32 %v358, 1e-08
      %v433 = vadd.f32 %v365, 1e-08
      %v434 = vadd.f32 %v372, 1e-08
      %v435 = vadd.f32 %v379, 1e-08
      %v436 = vadd.f32 %v386, 1e-08
      %v437 = vadd.f32 %v393, 1e-08
      %v438 = vadd.f32 %v400, 1e-08
      %v439 = vadd.f32 %v407, 1e-08
      %v440 = vrcp.pop %v408
      %v441 = vrcp.pop %v409
      %v442 = vrcp.pop %v410
      %v443 = vrcp.pop %v411
      %v444 = vrcp.pop %v412
      %v445 = vrcp.pop %v413
      %v446 = vrcp.pop %v414
      %v447 = vrcp.pop %v415
      %v448 = vrcp.pop %v416
      %v449 = vrcp.pop %v417
      %v450 = vrcp.pop %v418
      %v451 = vrcp.pop %v419
      %v452 = vrcp.pop %v420
      %v453 = vrcp.pop %v421
      %v454 = vrcp.pop %v422
      %v455 = vrcp.pop %v423
      %v456 = vrcp.pop %v424
      %v457 = vrcp.pop %v425
      %v458 = vrcp.pop %v426
      %v459 = vrcp.pop %v427
      %v460 = vrcp.pop %v428
      %v461 = vrcp.pop %v429
      %v462 = vrcp.pop %v430
      %v463 = vrcp.pop %v431
      %v464 = vrcp.pop %v432
      %v465 = vrcp.pop %v433
      %v466 = vrcp.pop %v434
      %v467 = vrcp.pop %v435
      %v468 = vrcp.pop %v436
      %v469 = vrcp.pop %v437
      %v470 = vrcp.pop %v438
      %v471 = vrcp.pop %v439
      %v472 = vmul.f32 %v23, %v440
      %v473 = vmul.f32 %v24, %v441
      %v474 = vmul.f32 %v25, %v442
      %v475 = vmul.f32 %v26, %v443
      %v476 = vmul.f32 %v27, %v444
      %v477 = vmul.f32 %v28, %v445
      %v478 = vmul.f32 %v29, %v446
      %v479 = vmul.f32 %v30, %v447
      %v480 = vmul.f32 %v31, %v448
      %v481 = vmul.f32 %v32, %v449
      %v482 = vmul.f32 %v33, %v450
      %v483 = vmul.f32 %v34, %v451
      %v484 = vmul.f32 %v35, %v452
      %v485 = vmul.f32 %v36, %v453
      %v486 = vmul.f32 %v37, %v454
      %v487 = vmul.f32 %v38, %v455
      %v488 = vmul.f32 %v39, %v456
      %v489 = vmul.f32 %v40, %v457
      %v490 = vmul.f32 %v41, %v458
      %v491 = vmul.f32 %v42, %v459
      %v492 = vmul.f32 %v43, %v460
      %v493 = vmul.f32 %v44, %v461
      %v494 = vmul.f32 %v45, %v462
      %v495 = vmul.f32 %v46, %v463
      %v496 = vmul.f32 %v47, %v464
      %v497 = vmul.f32 %v48, %v465
      %v498 = vmul.f32 %v49, %v466
      %v499 = vmul.f32 %v50, %v467
      %v500 = vmul.f32 %v51, %v468
      %v501 = vmul.f32 %v52, %v469
      %v502 = vmul.f32 %v53, %v470
      %v503 = vmul.f32 %v54, %v471
      %504 = vst.msk [vmem:[#allocation2] sm:$0xff] %vm87, %v472
      %505 = vst.msk [vmem:[#allocation2 + $0x8] sm:$0xff] %vm87, %v473
      %506 = vst.msk [vmem:[#allocation2 + $0x10] sm:$0xff] %vm87, %v474
      %507 = vst.msk [vmem:[#allocation2 + $0x18] sm:$0xff] %vm87, %v475
      %508 = vst.msk [vmem:[#allocation2 + $0x20] sm:$0xff] %vm87, %v476
      %509 = vst.msk [vmem:[#allocation2 + $0x28] sm:$0xff] %vm87, %v477
      %510 = vst.msk [vmem:[#allocation2 + $0x30] sm:$0xff] %vm87, %v478
      %511 = vst.msk [vmem:[#allocation2 + $0x38] sm:$0xff] %vm87, %v479
      %512 = vst.msk [vmem:[#allocation2 + $0x40] sm:$0xff] %vm87, %v480
      %513 = vst.msk [vmem:[#allocation2 + $0x48] sm:$0xff] %vm87, %v481
      %514 = vst.msk [vmem:[#allocation2 + $0x50] sm:$0xff] %vm87, %v482
      %515 = vst.msk [vmem:[#allocation2 + $0x58] sm:$0xff] %vm87, %v483
      %516 = vst.msk [vmem:[#allocation2 + $0x60] sm:$0xff] %vm87, %v484
      %517 = vst.msk [vmem:[#allocation2 + $0x68] sm:$0xff] %vm87, %v485
      %518 = vst.msk [vmem:[#allocation2 + $0x70] sm:$0xff] %vm87, %v486
      %519 = vst.msk [vmem:[#allocation2 + $0x78] sm:$0xff] %vm87, %v487
      %520 = vst.msk [vmem:[#allocation2 + $0x80] sm:$0xff] %vm87, %v488
      %521 = vst.msk [vmem:[#allocation2 + $0x88] sm:$0xff] %vm87, %v489
      %522 = vst.msk [vmem:[#allocation2 + $0x90] sm:$0xff] %vm87, %v490
      %523 = vst.msk [vmem:[#allocation2 + $0x98] sm:$0xff] %vm87, %v491
      %524 = vst.msk [vmem:[#allocation2 + $0xa0] sm:$0xff] %vm87, %v492
      %525 = vst.msk [vmem:[#allocation2 + $0xa8] sm:$0xff] %vm87, %v493
      %526 = vst.msk [vmem:[#allocation2 + $0xb0] sm:$0xff] %vm87, %v494
      %527 = vst.msk [vmem:[#allocation2 + $0xb8] sm:$0xff] %vm87, %v495
      %528 = vst.msk [vmem:[#allocation2 + $0xc0] sm:$0xff] %vm87, %v496
      %529 = vst.msk [vmem:[#allocation2 + $0xc8] sm:$0xff] %vm87, %v497
      %530 = vst.msk [vmem:[#allocation2 + $0xd0] sm:$0xff] %vm87, %v498
      %531 = vst.msk [vmem:[#allocation2 + $0xd8] sm:$0xff] %vm87, %v499
      %532 = vst.msk [vmem:[#allocation2 + $0xe0] sm:$0xff] %vm87, %v500
      %533 = vst.msk [vmem:[#allocation2 + $0xe8] sm:$0xff] %vm87, %v501
      %534 = vst.msk [vmem:[#allocation2 + $0xf0] sm:$0xff] %vm87, %v502
      %535 = vst.msk [vmem:[#allocation2 + $0xf8] sm:$0xff] %vm87, %v503
      %v536 = vlaneseq
      %vm537 = vcmp.ge.s32.totalorder %v536, 0
      %vm538 = vcmp.lt.s32.totalorder %v536, 256
      %vm539 = vmand %vm537, %vm538
      %540 = vst.msk [vmem:[#allocation3] sm:$0x3] %vm539, 0.0
      %v541 = vand.u32 2147483647, %v472
      %v542 = vand.u32 2147483647, %v473
      %v543 = vand.u32 2147483647, %v474
      %v544 = vand.u32 2147483647, %v475
      %v545 = vand.u32 2147483647, %v476
      %v546 = vand.u32 2147483647, %v477
      %v547 = vand.u32 2147483647, %v478
      %v548 = vand.u32 2147483647, %v479
      %v549 = vand.u32 2147483647, %v480
      %v550 = vand.u32 2147483647, %v481
      %v551 = vand.u32 2147483647, %v482
      %v552 = vand.u32 2147483647, %v483
      %v553 = vand.u32 2147483647, %v484
      %v554 = vand.u32 2147483647, %v485
      %v555 = vand.u32 2147483647, %v486
      %v556 = vand.u32 2147483647, %v487
      %v557 = vand.u32 2147483647, %v488
      %v558 = vand.u32 2147483647, %v489
      %v559 = vand.u32 2147483647, %v490
      %v560 = vand.u32 2147483647, %v491
      %v561 = vand.u32 2147483647, %v492
      %v562 = vand.u32 2147483647, %v493
      %v563 = vand.u32 2147483647, %v494
      %v564 = vand.u32 2147483647, %v495
      %v565 = vand.u32 2147483647, %v496
      %v566 = vand.u32 2147483647, %v497
      %v567 = vand.u32 2147483647, %v498
      %v568 = vand.u32 2147483647, %v499
      %v569 = vand.u32 2147483647, %v500
      %v570 = vand.u32 2147483647, %v501
      %v571 = vand.u32 2147483647, %v502
      %v572 = vand.u32 2147483647, %v503
      %v573 = vsub.f32 %v541, 1.0
      %v574 = vsub.f32 %v542, 1.0
      %v575 = vsub.f32 %v543, 1.0
      %v576 = vsub.f32 %v544, 1.0
      %v577 = vsub.f32 %v545, 1.0
      %v578 = vsub.f32 %v546, 1.0
      %v579 = vsub.f32 %v547, 1.0
      %v580 = vsub.f32 %v548, 1.0
      %v581 = vsub.f32 %v549, 1.0
      %v582 = vsub.f32 %v550, 1.0
      %v583 = vsub.f32 %v551, 1.0
      %v584 = vsub.f32 %v552, 1.0
      %v585 = vsub.f32 %v553, 1.0
      %v586 = vsub.f32 %v554, 1.0
      %v587 = vsub.f32 %v555, 1.0
      %v588 = vsub.f32 %v556, 1.0
      %v589 = vsub.f32 %v557, 1.0
      %v590 = vsub.f32 %v558, 1.0
      %v591 = vsub.f32 %v559, 1.0
      %v592 = vsub.f32 %v560, 1.0
      %v593 = vsub.f32 %v561, 1.0
      %v594 = vsub.f32 %v562, 1.0
      %v595 = vsub.f32 %v563, 1.0
      %v596 = vsub.f32 %v564, 1.0
      %v597 = vsub.f32 %v565, 1.0
      %v598 = vsub.f32 %v566, 1.0
      %v599 = vsub.f32 %v567, 1.0
      %v600 = vsub.f32 %v568, 1.0
      %v601 = vsub.f32 %v569, 1.0
      %v602 = vsub.f32 %v570, 1.0
      %v603 = vsub.f32 %v571, 1.0
      %v604 = vsub.f32 %v572, 1.0
      %v605 = vand.u32 2147483647, %v573
      %v606 = vand.u32 2147483647, %v574
      %v607 = vand.u32 2147483647, %v575
      %v608 = vand.u32 2147483647, %v576
      %v609 = vand.u32 2147483647, %v577
      %v610 = vand.u32 2147483647, %v578
      %v611 = vand.u32 2147483647, %v579
      %v612 = vand.u32 2147483647, %v580
      %v613 = vand.u32 2147483647, %v581
      %v614 = vand.u32 2147483647, %v582
      %v615 = vand.u32 2147483647, %v583
      %v616 = vand.u32 2147483647, %v584
      %v617 = vand.u32 2147483647, %v585
      %v618 = vand.u32 2147483647, %v586
      %v619 = vand.u32 2147483647, %v587
      %v620 = vand.u32 2147483647, %v588
      %v621 = vand.u32 2147483647, %v589
      %v622 = vand.u32 2147483647, %v590
      %v623 = vand.u32 2147483647, %v591
      %v624 = vand.u32 2147483647, %v592
      %v625 = vand.u32 2147483647, %v593
      %v626 = vand.u32 2147483647, %v594
      %v627 = vand.u32 2147483647, %v595
      %v628 = vand.u32 2147483647, %v596
      %v629 = vand.u32 2147483647, %v597
      %v630 = vand.u32 2147483647, %v598
      %v631 = vand.u32 2147483647, %v599
      %v632 = vand.u32 2147483647, %v600
      %v633 = vand.u32 2147483647, %v601
      %v634 = vand.u32 2147483647, %v602
      %v635 = vand.u32 2147483647, %v603
      %v636 = vand.u32 2147483647, %v604
      %v637 = vsel %vm87, %v605, 0.0
      %v638 = vsel %vm87, %v606, 0.0
      %v639 = vadd.f32 %v637, %v638
      %v640 = vsel %vm87, %v607, 0.0
      %v641 = vadd.f32 %v639, %v640
      %v642 = vsel %vm87, %v608, 0.0
      %v643 = vadd.f32 %v641, %v642
      %v644 = vsel %vm87, %v609, 0.0
      %v645 = vadd.f32 %v643, %v644
      %v646 = vsel %vm87, %v610, 0.0
      %v647 = vadd.f32 %v645, %v646
      %v648 = vsel %vm87, %v611, 0.0
      %v649 = vadd.f32 %v647, %v648
      %v650 = vsel %vm87, %v612, 0.0
      %v651 = vadd.f32 %v649, %v650
      %v652 = vsel %vm87, %v613, 0.0
      %v653 = vadd.f32 %v651, %v652
      %v654 = vsel %vm87, %v614, 0.0
      %v655 = vadd.f32 %v653, %v654
      %v656 = vsel %vm87, %v615, 0.0
      %v657 = vadd.f32 %v655, %v656
      %v658 = vsel %vm87, %v616, 0.0
      %v659 = vadd.f32 %v657, %v658
      %v660 = vsel %vm87, %v617, 0.0
      %v661 = vadd.f32 %v659, %v660
      %v662 = vsel %vm87, %v618, 0.0
      %v663 = vadd.f32 %v661, %v662
      %v664 = vsel %vm87, %v619, 0.0
      %v665 = vadd.f32 %v663, %v664
      %v666 = vsel %vm87, %v620, 0.0
      %v667 = vadd.f32 %v665, %v666
      %v668 = vsel %vm87, %v621, 0.0
      %v669 = vadd.f32 %v667, %v668
      %v670 = vsel %vm87, %v622, 0.0
      %v671 = vadd.f32 %v669, %v670
      %v672 = vsel %vm87, %v623, 0.0
      %v673 = vadd.f32 %v671, %v672
      %v674 = vsel %vm87, %v624, 0.0
      %v675 = vadd.f32 %v673, %v674
      %v676 = vsel %vm87, %v625, 0.0
      %v677 = vadd.f32 %v675, %v676
      %v678 = vsel %vm87, %v626, 0.0
      %v679 = vadd.f32 %v677, %v678
      %v680 = vsel %vm87, %v627, 0.0
      %v681 = vadd.f32 %v679, %v680
      %v682 = vsel %vm87, %v628, 0.0
      %v683 = vadd.f32 %v681, %v682
      %v684 = vsel %vm87, %v629, 0.0
      %v685 = vadd.f32 %v683, %v684
      %v686 = vsel %vm87, %v630, 0.0
      %v687 = vadd.f32 %v685, %v686
      %v688 = vsel %vm87, %v631, 0.0
      %v689 = vadd.f32 %v687, %v688
      %v690 = vsel %vm87, %v632, 0.0
      %v691 = vadd.f32 %v689, %v690
      %v692 = vsel %vm87, %v633, 0.0
      %v693 = vadd.f32 %v691, %v692
      %v694 = vsel %vm87, %v634, 0.0
      %v695 = vadd.f32 %v693, %v694
      %v696 = vsel %vm87, %v635, 0.0
      %v697 = vadd.f32 %v695, %v696
      %v698 = vsel %vm87, %v636, 0.0
      %v699 = vadd.f32 %v697, %v698
      %700 = vadd.xlane.f32.xlu0 %v699
      %v701 = vpop.xlane.xlu0 %700
      %v702 = vrot.slane %v701, 4
      %v703 = vadd.f32 %v701, %v702
      %v704 = vrot.slane %v703, 2
      %v705 = vadd.f32 %v703, %v704
      %v706 = vrot.slane %v705, 1
      %v707 = vadd.f32 %v705, %v706
      %s708 = vtos %v707
      %s709 = scalar_lea.smem [#allocation4], 0
      %710 = sst [smem:[%s709]] %s708
    $region21: #{tpu_custom_call.1} parent=1 // pred_fallthru
      _
    %s711 = smul.u32 0, 256
    %s712 = scalar_lea.vmem [#allocation2], %s711
    %v713 = vld [vmem:[%s712] sm:$0xff]
    %v714 = vld [vmem:[%s712 + $0x8] sm:$0xff]
    %v715 = vld [vmem:[%s712 + $0x10] sm:$0xff]
    %v716 = vld [vmem:[%s712 + $0x18] sm:$0xff]
    %v717 = vld [vmem:[%s712 + $0x20] sm:$0xff]
    %v718 = vld [vmem:[%s712 + $0x28] sm:$0xff]
    %v719 = vld [vmem:[%s712 + $0x30] sm:$0xff]
    %v720 = vld [vmem:[%s712 + $0x38] sm:$0xff]
    %v721 = vld [vmem:[%s712 + $0x40] sm:$0xff]
    %v722 = vld [vmem:[%s712 + $0x48] sm:$0xff]
    %v723 = vld [vmem:[%s712 + $0x50] sm:$0xff]
    %v724 = vld [vmem:[%s712 + $0x58] sm:$0xff]
    %v725 = vld [vmem:[%s712 + $0x60] sm:$0xff]
    %v726 = vld [vmem:[%s712 + $0x68] sm:$0xff]
    %v727 = vld [vmem:[%s712 + $0x70] sm:$0xff]
    %v728 = vld [vmem:[%s712 + $0x78] sm:$0xff]
    %v729 = vld [vmem:[%s712 + $0x80] sm:$0xff]
    %v730 = vld [vmem:[%s712 + $0x88] sm:$0xff]
    %v731 = vld [vmem:[%s712 + $0x90] sm:$0xff]
    %v732 = vld [vmem:[%s712 + $0x98] sm:$0xff]
    %v733 = vld [vmem:[%s712 + $0xa0] sm:$0xff]
    %v734 = vld [vmem:[%s712 + $0xa8] sm:$0xff]
    %v735 = vld [vmem:[%s712 + $0xb0] sm:$0xff]
    %v736 = vld [vmem:[%s712 + $0xb8] sm:$0xff]
    %v737 = vld [vmem:[%s712 + $0xc0] sm:$0xff]
    %v738 = vld [vmem:[%s712 + $0xc8] sm:$0xff]
    %v739 = vld [vmem:[%s712 + $0xd0] sm:$0xff]
    %v740 = vld [vmem:[%s712 + $0xd8] sm:$0xff]
    %v741 = vld [vmem:[%s712 + $0xe0] sm:$0xff]
    %v742 = vld [vmem:[%s712 + $0xe8] sm:$0xff]
    %v743 = vld [vmem:[%s712 + $0xf0] sm:$0xff]
    %v744 = vld [vmem:[%s712 + $0xf8] sm:$0xff]
    %v745 = vld [vmem:[#allocation2] sm:$0xff]
    %v746 = vld [vmem:[#allocation2 + $0x8] sm:$0xff]
    %v747 = vld [vmem:[#allocation2 + $0x10] sm:$0xff]
    %v748 = vld [vmem:[#allocation2 + $0x18] sm:$0xff]
    %v749 = vld [vmem:[#allocation2 + $0x20] sm:$0xff]
    %v750 = vld [vmem:[#allocation2 + $0x28] sm:$0xff]
    %v751 = vld [vmem:[#allocation2 + $0x30] sm:$0xff]
    %v752 = vld [vmem:[#allocation2 + $0x38] sm:$0xff]
    %v753 = vld [vmem:[#allocation2 + $0x40] sm:$0xff]
    %v754 = vld [vmem:[#allocation2 + $0x48] sm:$0xff]
    %v755 = vld [vmem:[#allocation2 + $0x50] sm:$0xff]
    %v756 = vld [vmem:[#allocation2 + $0x58] sm:$0xff]
    %v757 = vld [vmem:[#allocation2 + $0x60] sm:$0xff]
    %v758 = vld [vmem:[#allocation2 + $0x68] sm:$0xff]
    %v759 = vld [vmem:[#allocation2 + $0x70] sm:$0xff]
    %v760 = vld [vmem:[#allocation2 + $0x78] sm:$0xff]
    %v761 = vld [vmem:[#allocation2 + $0x80] sm:$0xff]
    %v762 = vld [vmem:[#allocation2 + $0x88] sm:$0xff]
    %v763 = vld [vmem:[#allocation2 + $0x90] sm:$0xff]
    %v764 = vld [vmem:[#allocation2 + $0x98] sm:$0xff]
    %v765 = vld [vmem:[#allocation2 + $0xa0] sm:$0xff]
    %v766 = vld [vmem:[#allocation2 + $0xa8] sm:$0xff]
    %v767 = vld [vmem:[#allocation2 + $0xb0] sm:$0xff]
    %v768 = vld [vmem:[#allocation2 + $0xb8] sm:$0xff]
    %v769 = vld [vmem:[#allocation2 + $0xc0] sm:$0xff]
    %v770 = vld [vmem:[#allocation2 + $0xc8] sm:$0xff]
    %v771 = vld [vmem:[#allocation2 + $0xd0] sm:$0xff]
    %v772 = vld [vmem:[#allocation2 + $0xd8] sm:$0xff]
    %v773 = vld [vmem:[#allocation2 + $0xe0] sm:$0xff]
    %v774 = vld [vmem:[#allocation2 + $0xe8] sm:$0xff]
    %v775 = vld [vmem:[#allocation2 + $0xf0] sm:$0xff]
    %v776 = vld [vmem:[#allocation2 + $0xf8] sm:$0xff]
    %vm777 = vcmask 261120
    %v779 = vsel %vm777, %v713, 0
    %v782 = vsel %vm777, %v714, 0
    %v785 = vsel %vm777, %v715, 0
    %v788 = vsel %vm777, %v716, 0
    %v791 = vsel %vm777, %v717, 0
    %v794 = vsel %vm777, %v718, 0
    %v797 = vsel %vm777, %v719, 0
    %v800 = vsel %vm777, %v720, 0
    %v803 = vsel %vm777, %v721, 0
    %v806 = vsel %vm777, %v722, 0
    %v809 = vsel %vm777, %v723, 0
    %v812 = vsel %vm777, %v724, 0
    %v815 = vsel %vm777, %v725, 0
    %v818 = vsel %vm777, %v726, 0
    %v821 = vsel %vm777, %v727, 0
    %v824 = vsel %vm777, %v728, 0
    %v827 = vsel %vm777, %v729, 0
    %v830 = vsel %vm777, %v730, 0
    %v833 = vsel %vm777, %v731, 0
    %v836 = vsel %vm777, %v732, 0
    %v839 = vsel %vm777, %v733, 0
    %v842 = vsel %vm777, %v734, 0
    %v845 = vsel %vm777, %v735, 0
    %v848 = vsel %vm777, %v736, 0
    %v851 = vsel %vm777, %v737, 0
    %v854 = vsel %vm777, %v738, 0
    %v857 = vsel %vm777, %v739, 0
    %v860 = vsel %vm777, %v740, 0
    %v863 = vsel %vm777, %v741, 0
    %v866 = vsel %vm777, %v742, 0
    %v869 = vsel %vm777, %v743, 0
    %v872 = vsel %vm777, %v744, 0
    %v875 = vsel %vm777, %v745, 0
    %v878 = vsel %vm777, %v746, 0
    %v881 = vsel %vm777, %v747, 0
    %v884 = vsel %vm777, %v748, 0
    %v887 = vsel %vm777, %v749, 0
    %v890 = vsel %vm777, %v750, 0
    %v893 = vsel %vm777, %v751, 0
    %v896 = vsel %vm777, %v752, 0
    %v899 = vsel %vm777, %v753, 0
    %v902 = vsel %vm777, %v754, 0
    %v905 = vsel %vm777, %v755, 0
    %v908 = vsel %vm777, %v756, 0
    %v911 = vsel %vm777, %v757, 0
    %v914 = vsel %vm777, %v758, 0
    %v917 = vsel %vm777, %v759, 0
    %v920 = vsel %vm777, %v760, 0
    %v923 = vsel %vm777, %v761, 0
    %v926 = vsel %vm777, %v762, 0
    %v929 = vsel %vm777, %v763, 0
    %v932 = vsel %vm777, %v764, 0
    %v935 = vsel %vm777, %v765, 0
    %v938 = vsel %vm777, %v766, 0
    %v941 = vsel %vm777, %v767, 0
    %v944 = vsel %vm777, %v768, 0
    %v947 = vsel %vm777, %v769, 0
    %v950 = vsel %vm777, %v770, 0
    %v953 = vsel %vm777, %v771, 0
    %v956 = vsel %vm777, %v772, 0
    %v959 = vsel %vm777, %v773, 0
    %v962 = vsel %vm777, %v774, 0
    %v965 = vsel %vm777, %v775, 0
    %v968 = vsel %vm777, %v776, 0
    %970 = vmatprep.subr.mxu0 0.0
    %971 = vmatpush1.xpose.msra.mxu0 %v875
    %972 = vmatprep.subr.mxu0 0.0
    %973 = vmatpush1.xpose.msra.mxu0 %v878
    %974 = vmatprep.subr.mxu0 0.0
    %975 = vmatpush1.xpose.msra.mxu0 %v881
    %976 = vmatprep.subr.mxu0 0.0
    %977 = vmatpush1.xpose.msra.mxu0 %v884
    %978 = vmatprep.subr.mxu0 0.0
    %979 = vmatpush1.xpose.msra.mxu0 %v887
    %980 = vmatprep.subr.mxu0 0.0
    %981 = vmatpush1.xpose.msra.mxu0 %v890
    %982 = vmatprep.subr.mxu0 0.0
    %983 = vmatpush1.xpose.msra.mxu0 %v893
    %984 = vmatprep.subr.mxu0 0.0
    %985 = vmatpush1.xpose.msra.mxu0 %v896
    %986 = vmatprep.subr.mxu0 0.0
    %987 = vmatpush1.xpose.msra.mxu0 %v899
    %988 = vmatprep.subr.mxu0 0.0
    %989 = vmatpush1.xpose.msra.mxu0 %v902
    %990 = vmatprep.subr.mxu0 0.0
    %991 = vmatpush1.xpose.msra.mxu0 %v905
    %992 = vmatprep.subr.mxu0 0.0
    %993 = vmatpush1.xpose.msra.mxu0 %v908
    %994 = vmatprep.subr.mxu0 0.0
    %995 = vmatpush1.xpose.msra.mxu0 %v911
    %996 = vmatprep.subr.mxu0 0.0
    %997 = vmatpush1.xpose.msra.mxu0 %v914
    %998 = vmatprep.subr.mxu0 0.0
    %999 = vmatpush1.xpose.msra.mxu0 %v917
    %1000 = vmatprep.subr.mxu0 0.0
    %1001 = vmatpush1.xpose.msra.mxu0 %v920
    %1002 = vmatprep.subr.mxu0 0.0
    %1003 = vmatpush1.xpose.msra.mxu0 %v923
    %1004 = vmatprep.subr.mxu0 0.0
    %1005 = vmatpush1.xpose.msra.mxu0 %v926
    %1006 = vmatprep.subr.mxu0 0.0
    %1007 = vmatpush1.xpose.msra.mxu0 %v929
    %1008 = vmatprep.subr.mxu0 0.0
    %1009 = vmatpush1.xpose.msra.mxu0 %v932
    %1010 = vmatprep.subr.mxu0 0.0
    %1011 = vmatpush1.xpose.msra.mxu0 %v935
    %1012 = vmatprep.subr.mxu0 0.0
    %1013 = vmatpush1.xpose.msra.mxu0 %v938
    %1014 = vmatprep.subr.mxu0 0.0
    %1015 = vmatpush1.xpose.msra.mxu0 %v941
    %1016 = vmatprep.subr.mxu0 0.0
    %1017 = vmatpush1.xpose.msra.mxu0 %v944
    %1018 = vmatprep.subr.mxu0 0.0
    %1019 = vmatpush1.xpose.msra.mxu0 %v947
    %1020 = vmatprep.subr.mxu0 0.0
    %1021 = vmatpush1.xpose.msra.mxu0 %v950
    %1022 = vmatprep.subr.mxu0 0.0
    %1023 = vmatpush1.xpose.msra.mxu0 %v953
    %1024 = vmatprep.subr.mxu0 0.0
    %1025 = vmatpush1.xpose.msra.mxu0 %v956
    %1026 = vmatprep.subr.mxu0 0.0
    %1027 = vmatpush1.xpose.msra.mxu0 %v959
    %1028 = vmatprep.subr.mxu0 0.0
    %1029 = vmatpush1.xpose.msra.mxu0 %v962
    %1030 = vmatprep.subr.mxu0 0.0
    %1031 = vmatpush1.xpose.msra.mxu0 %v965
    %1032 = vmatprep.subr.mxu0 0.0
    %1033 = vmatpush1.xpose.msra.mxu0 %v968
    %1034 = vmatprep.mubr.f32.mxu0 0.0
    %1035 = vmatmul.mubr.f32.gmra.mrb[0].mxu0 %v779
    %v1036 = vpop.f32.mrb[0].mxu0
    %v1037 = vadd.f32 1.0, %v1036
    %v1038 = vpop.f32.mrb[0].mxu0
    %v1039 = vadd.f32 1.0, %v1038
    %1040 = vmatprep.mubr.f32.mxu0 0.0
    %1041 = vmatmul.mubr.f32.gmra.mrb[0].mxu0 %v782
    %v1042 = vpop.f32.mrb[0].mxu0
    %v1043 = vadd.f32 1.0, %v1042
    %v1044 = vpop.f32.mrb[0].mxu0
    %v1045 = vadd.f32 1.0, %v1044
    %1046 = vmatprep.mubr.f32.mxu0 0.0
    %1047 = vmatmul.mubr.f32.gmra.mrb[0].mxu0 %v785
    %v1048 = vpop.f32.mrb[0].mxu0
    %v1049 = vadd.f32 1.0, %v1048
    %v1050 = vpop.f32.mrb[0].mxu0
    %v1051 = vadd.f32 1.0, %v1050
    %1052 = vmatprep.mubr.f32.mxu0 0.0
    %1053 = vmatmul.mubr.f32.gmra.mrb[0].mxu0 %v788
    %v1054 = vpop.f32.mrb[0].mxu0
    %v1055 = vadd.f32 1.0, %v1054
    %v1056 = vpop.f32.mrb[0].mxu0
    %v1057 = vadd.f32 1.0, %v1056
    %1058 = vmatprep.mubr.f32.mxu0 0.0
    %1059 = vmatmul.mubr.f32.gmra.mrb[0].mxu0 %v791
    %v1060 = vpop.f32.mrb[0].mxu0
    %v1061 = vadd.f32 1.0, %v1060
    %v1062 = vpop.f32.mrb[0].mxu0
    %v1063 = vadd.f32 1.0, %v1062
    %1064 = vmatprep.mubr.f32.mxu0 0.0
    %1065 = vmatmul.mubr.f32.gmra.mrb[0].mxu0 %v794
    %v1066 = vpop.f32.mrb[0].mxu0
    %v1067 = vadd.f32 1.0, %v1066
    %v1068 = vpop.f32.mrb[0].mxu0
    %v1069 = vadd.f32 1.0, %v1068
    %1070 = vmatprep.mubr.f32.mxu0 0.0
    %1071 = vmatmul.mubr.f32.gmra.mrb[0].mxu0 %v797
    %v1072 = vpop.f32.mrb[0].mxu0
    %v1073 = vadd.f32 1.0, %v1072
    %v1074 = vpop.f32.mrb[0].mxu0
    %v1075 = vadd.f32 1.0, %v1074
    %1076 = vmatprep.mubr.f32.mxu0 0.0
    %1077 = vmatmul.mubr.f32.gmra.mrb[0].mxu0 %v800
    %v1078 = vpop.f32.mrb[0].mxu0
    %v1079 = vadd.f32 1.0, %v1078
    %v1080 = vpop.f32.mrb[0].mxu0
    %v1081 = vadd.f32 1.0, %v1080
    %1082 = vmatprep.mubr.f32.mxu0 0.0
    %1083 = vmatmul.mubr.f32.gmra.mrb[0].mxu0 %v803
    %v1084 = vpop.f32.mrb[0].mxu0
    %v1085 = vadd.f32 1.0, %v1084
    %v1086 = vpop.f32.mrb[0].mxu0
    %v1087 = vadd.f32 1.0, %v1086
    %1088 = vmatprep.mubr.f32.mxu0 0.0
    %1089 = vmatmul.mubr.f32.gmra.mrb[0].mxu0 %v806
    %v1090 = vpop.f32.mrb[0].mxu0
    %v1091 = vadd.f32 1.0, %v1090
    %v1092 = vpop.f32.mrb[0].mxu0
    %v1093 = vadd.f32 1.0, %v1092
    %1094 = vmatprep.mubr.f32.mxu0 0.0
    %1095 = vmatmul.mubr.f32.gmra.mrb[0].mxu0 %v809
    %v1096 = vpop.f32.mrb[0].mxu0
    %v1097 = vadd.f32 1.0, %v1096
    %v1098 = vpop.f32.mrb[0].mxu0
    %v1099 = vadd.f32 1.0, %v1098
    %1100 = vmatprep.mubr.f32.mxu0 0.0
    %1101 = vmatmul.mubr.f32.gmra.mrb[0].mxu0 %v812
    %v1102 = vpop.f32.mrb[0].mxu0
    %v1103 = vadd.f32 1.0, %v1102
    %v1104 = vpop.f32.mrb[0].mxu0
    %v1105 = vadd.f32 1.0, %v1104
    %1106 = vmatprep.mubr.f32.mxu0 0.0
    %1107 = vmatmul.mubr.f32.gmra.mrb[0].mxu0 %v815
    %v1108 = vpop.f32.mrb[0].mxu0
    %v1109 = vadd.f32 1.0, %v1108
    %v1110 = vpop.f32.mrb[0].mxu0
    %v1111 = vadd.f32 1.0, %v1110
    %1112 = vmatprep.mubr.f32.mxu0 0.0
    %1113 = vmatmul.mubr.f32.gmra.mrb[0].mxu0 %v818
    %v1114 = vpop.f32.mrb[0].mxu0
    %v1115 = vadd.f32 1.0, %v1114
    %v1116 = vpop.f32.mrb[0].mxu0
    %v1117 = vadd.f32 1.0, %v1116
    %1118 = vmatprep.mubr.f32.mxu0 0.0
    %1119 = vmatmul.mubr.f32.gmra.mrb[0].mxu0 %v821
    %v1120 = vpop.f32.mrb[0].mxu0
    %v1121 = vadd.f32 1.0, %v1120
    %v1122 = vpop.f32.mrb[0].mxu0
    %v1123 = vadd.f32 1.0, %v1122
    %1124 = vmatprep.mubr.f32.mxu0 0.0
    %1125 = vmatmul.mubr.f32.gmra.mrb[0].mxu0 %v824
    %v1126 = vpop.f32.mrb[0].mxu0
    %v1127 = vadd.f32 1.0, %v1126
    %v1128 = vpop.f32.mrb[0].mxu0
    %v1129 = vadd.f32 1.0, %v1128
    %1130 = vmatprep.mubr.f32.mxu0 0.0
    %1131 = vmatmul.mubr.f32.gmra.mrb[0].mxu0 %v827
    %v1132 = vpop.f32.mrb[0].mxu0
    %v1133 = vadd.f32 1.0, %v1132
    %v1134 = vpop.f32.mrb[0].mxu0
    %v1135 = vadd.f32 1.0, %v1134
    %1136 = vmatprep.mubr.f32.mxu0 0.0
    %1137 = vmatmul.mubr.f32.gmra.mrb[0].mxu0 %v830
    %v1138 = vpop.f32.mrb[0].mxu0
    %v1139 = vadd.f32 1.0, %v1138
    %v1140 = vpop.f32.mrb[0].mxu0
    %v1141 = vadd.f32 1.0, %v1140
    %1142 = vmatprep.mubr.f32.mxu0 0.0
    %1143 = vmatmul.mubr.f32.gmra.mrb[0].mxu0 %v833
    %v1144 = vpop.f32.mrb[0].mxu0
    %v1145 = vadd.f32 1.0, %v1144
    %v1146 = vpop.f32.mrb[0].mxu0
    %v1147 = vadd.f32 1.0, %v1146
    %1148 = vmatprep.mubr.f32.mxu0 0.0
    %1149 = vmatmul.mubr.f32.gmra.mrb[0].mxu0 %v836
    %v1150 = vpop.f32.mrb[0].mxu0
    %v1151 = vadd.f32 1.0, %v1150
    %v1152 = vpop.f32.mrb[0].mxu0
    %v1153 = vadd.f32 1.0, %v1152
    %1154 = vmatprep.mubr.f32.mxu0 0.0
    %1155 = vmatmul.mubr.f32.gmra.mrb[0].mxu0 %v839
    %v1156 = vpop.f32.mrb[0].mxu0
    %v1157 = vadd.f32 1.0, %v1156
    %v1158 = vpop.f32.mrb[0].mxu0
    %v1159 = vadd.f32 1.0, %v1158
    %1160 = vmatprep.mubr.f32.mxu0 0.0
    %1161 = vmatmul.mubr.f32.gmra.mrb[0].mxu0 %v842
    %v1162 = vpop.f32.mrb[0].mxu0
    %v1163 = vadd.f32 1.0, %v1162
    %v1164 = vpop.f32.mrb[0].mxu0
    %v1165 = vadd.f32 1.0, %v1164
    %1166 = vmatprep.mubr.f32.mxu0 0.0
    %1167 = vmatmul.mubr.f32.gmra.mrb[0].mxu0 %v845
    %v1168 = vpop.f32.mrb[0].mxu0
    %v1169 = vadd.f32 1.0, %v1168
    %v1170 = vpop.f32.mrb[0].mxu0
    %v1171 = vadd.f32 1.0, %v1170
    %1172 = vmatprep.mubr.f32.mxu0 0.0
    %1173 = vmatmul.mubr.f32.gmra.mrb[0].mxu0 %v848
    %v1174 = vpop.f32.mrb[0].mxu0
    %v1175 = vadd.f32 1.0, %v1174
    %v1176 = vpop.f32.mrb[0].mxu0
    %v1177 = vadd.f32 1.0, %v1176
    %1178 = vmatprep.mubr.f32.mxu0 0.0
    %1179 = vmatmul.mubr.f32.gmra.mrb[0].mxu0 %v851
    %v1180 = vpop.f32.mrb[0].mxu0
    %v1181 = vadd.f32 1.0, %v1180
    %v1182 = vpop.f32.mrb[0].mxu0
    %v1183 = vadd.f32 1.0, %v1182
    %1184 = vmatprep.mubr.f32.mxu0 0.0
    %1185 = vmatmul.mubr.f32.gmra.mrb[0].mxu0 %v854
    %v1186 = vpop.f32.mrb[0].mxu0
    %v1187 = vadd.f32 1.0, %v1186
    %v1188 = vpop.f32.mrb[0].mxu0
    %v1189 = vadd.f32 1.0, %v1188
    %1190 = vmatprep.mubr.f32.mxu0 0.0
    %1191 = vmatmul.mubr.f32.gmra.mrb[0].mxu0 %v857
    %v1192 = vpop.f32.mrb[0].mxu0
    %v1193 = vadd.f32 1.0, %v1192
    %v1194 = vpop.f32.mrb[0].mxu0
    %v1195 = vadd.f32 1.0, %v1194
    %1196 = vmatprep.mubr.f32.mxu0 0.0
    %1197 = vmatmul.mubr.f32.gmra.mrb[0].mxu0 %v860
    %v1198 = vpop.f32.mrb[0].mxu0
    %v1199 = vadd.f32 1.0, %v1198
    %v1200 = vpop.f32.mrb[0].mxu0
    %v1201 = vadd.f32 1.0, %v1200
    %1202 = vmatprep.mubr.f32.mxu0 0.0
    %1203 = vmatmul.mubr.f32.gmra.mrb[0].mxu0 %v863
    %v1204 = vpop.f32.mrb[0].mxu0
    %v1205 = vadd.f32 1.0, %v1204
    %v1206 = vpop.f32.mrb[0].mxu0
    %v1207 = vadd.f32 1.0, %v1206
    %1208 = vmatprep.mubr.f32.mxu0 0.0
    %1209 = vmatmul.mubr.f32.gmra.mrb[0].mxu0 %v866
    %v1210 = vpop.f32.mrb[0].mxu0
    %v1211 = vadd.f32 1.0, %v1210
    %v1212 = vpop.f32.mrb[0].mxu0
    %v1213 = vadd.f32 1.0, %v1212
    %1214 = vmatprep.mubr.f32.mxu0 0.0
    %1215 = vmatmul.mubr.f32.gmra.mrb[0].mxu0 %v869
    %v1216 = vpop.f32.mrb[0].mxu0
    %v1217 = vadd.f32 1.0, %v1216
    %v1218 = vpop.f32.mrb[0].mxu0
    %v1219 = vadd.f32 1.0, %v1218
    %1220 = vmatprep.mubr.f32.mxu0 0.0
    %1221 = vmatmul.mubr.f32.gmra.mrb[0].mxu0 %v872
    %v1222 = vpop.f32.mrb[0].mxu0
    %v1223 = vadd.f32 1.0, %v1222
    %v1224 = vpop.f32.mrb[0].mxu0
    %v1225 = vadd.f32 1.0, %v1224
    %1226 = vdwg.mxu0
    %v1227 = vmul.f32 %v1037, 0.5
    %v1228 = vmul.f32 %v1039, 0.5
    %v1229 = vmul.f32 %v1043, 0.5
    %v1230 = vmul.f32 %v1045, 0.5
    %v1231 = vmul.f32 %v1049, 0.5
    %v1232 = vmul.f32 %v1051, 0.5
    %v1233 = vmul.f32 %v1055, 0.5
    %v1234 = vmul.f32 %v1057, 0.5
    %v1235 = vmul.f32 %v1061, 0.5
    %v1236 = vmul.f32 %v1063, 0.5
    %v1237 = vmul.f32 %v1067, 0.5
    %v1238 = vmul.f32 %v1069, 0.5
    %v1239 = vmul.f32 %v1073, 0.5
    %v1240 = vmul.f32 %v1075, 0.5
    %v1241 = vmul.f32 %v1079, 0.5
    %v1242 = vmul.f32 %v1081, 0.5
    %v1243 = vmul.f32 %v1085, 0.5
    %v1244 = vmul.f32 %v1087, 0.5
    %v1245 = vmul.f32 %v1091, 0.5
    %v1246 = vmul.f32 %v1093, 0.5
    %v1247 = vmul.f32 %v1097, 0.5
    %v1248 = vmul.f32 %v1099, 0.5
    %v1249 = vmul.f32 %v1103, 0.5
    %v1250 = vmul.f32 %v1105, 0.5
    %v1251 = vmul.f32 %v1109, 0.5
    %v1252 = vmul.f32 %v1111, 0.5
    %v1253 = vmul.f32 %v1115, 0.5
    %v1254 = vmul.f32 %v1117, 0.5
    %v1255 = vmul.f32 %v1121, 0.5
    %v1256 = vmul.f32 %v1123, 0.5
    %v1257 = vmul.f32 %v1127, 0.5
    %v1258 = vmul.f32 %v1129, 0.5
    %v1259 = vmul.f32 %v1133, 0.5
    %v1260 = vmul.f32 %v1135, 0.5
    %v1261 = vmul.f32 %v1139, 0.5
    %v1262 = vmul.f32 %v1141, 0.5
    %v1263 = vmul.f32 %v1145, 0.5
    %v1264 = vmul.f32 %v1147, 0.5
    %v1265 = vmul.f32 %v1151, 0.5
    %v1266 = vmul.f32 %v1153, 0.5
    %v1267 = vmul.f32 %v1157, 0.5
    %v1268 = vmul.f32 %v1159, 0.5
    %v1269 = vmul.f32 %v1163, 0.5
    %v1270 = vmul.f32 %v1165, 0.5
    %v1271 = vmul.f32 %v1169, 0.5
    %v1272 = vmul.f32 %v1171, 0.5
    %v1273 = vmul.f32 %v1175, 0.5
    %v1274 = vmul.f32 %v1177, 0.5
    %v1275 = vmul.f32 %v1181, 0.5
    %v1276 = vmul.f32 %v1183, 0.5
    %v1277 = vmul.f32 %v1187, 0.5
    %v1278 = vmul.f32 %v1189, 0.5
    %v1279 = vmul.f32 %v1193, 0.5
    %v1280 = vmul.f32 %v1195, 0.5
    %v1281 = vmul.f32 %v1199, 0.5
    %v1282 = vmul.f32 %v1201, 0.5
    %v1283 = vmul.f32 %v1205, 0.5
    %v1284 = vmul.f32 %v1207, 0.5
    %v1285 = vmul.f32 %v1211, 0.5
    %v1286 = vmul.f32 %v1213, 0.5
    %v1287 = vmul.f32 %v1217, 0.5
    %v1288 = vmul.f32 %v1219, 0.5
    %v1289 = vmul.f32 %v1223, 0.5
    %v1290 = vmul.f32 %v1225, 0.5
    %s1291 = scalar_lea.vmem %s2, %s711
    %v1292 = vld [vmem:[%s1291] sm:$0xff]
    %v1293 = vld [vmem:[%s1291 + $0x8] sm:$0xff]
    %v1294 = vld [vmem:[%s1291 + $0x10] sm:$0xff]
    %v1295 = vld [vmem:[%s1291 + $0x18] sm:$0xff]
    %v1296 = vld [vmem:[%s1291 + $0x20] sm:$0xff]
    %v1297 = vld [vmem:[%s1291 + $0x28] sm:$0xff]
    %v1298 = vld [vmem:[%s1291 + $0x30] sm:$0xff]
    %v1299 = vld [vmem:[%s1291 + $0x38] sm:$0xff]
    %v1300 = vld [vmem:[%s1291 + $0x40] sm:$0xff]
    %v1301 = vld [vmem:[%s1291 + $0x48] sm:$0xff]
    %v1302 = vld [vmem:[%s1291 + $0x50] sm:$0xff]
    %v1303 = vld [vmem:[%s1291 + $0x58] sm:$0xff]
    %v1304 = vld [vmem:[%s1291 + $0x60] sm:$0xff]
    %v1305 = vld [vmem:[%s1291 + $0x68] sm:$0xff]
    %v1306 = vld [vmem:[%s1291 + $0x70] sm:$0xff]
    %v1307 = vld [vmem:[%s1291 + $0x78] sm:$0xff]
    %v1308 = vld [vmem:[%s1291 + $0x80] sm:$0xff]
    %v1309 = vld [vmem:[%s1291 + $0x88] sm:$0xff]
    %v1310 = vld [vmem:[%s1291 + $0x90] sm:$0xff]
    %v1311 = vld [vmem:[%s1291 + $0x98] sm:$0xff]
    %v1312 = vld [vmem:[%s1291 + $0xa0] sm:$0xff]
    %v1313 = vld [vmem:[%s1291 + $0xa8] sm:$0xff]
    %v1314 = vld [vmem:[%s1291 + $0xb0] sm:$0xff]
    %v1315 = vld [vmem:[%s1291 + $0xb8] sm:$0xff]
    %v1316 = vld [vmem:[%s1291 + $0xc0] sm:$0xff]
    %v1317 = vld [vmem:[%s1291 + $0xc8] sm:$0xff]
    %v1318 = vld [vmem:[%s1291 + $0xd0] sm:$0xff]
    %v1319 = vld [vmem:[%s1291 + $0xd8] sm:$0xff]
    %v1320 = vld [vmem:[%s1291 + $0xe0] sm:$0xff]
    %v1321 = vld [vmem:[%s1291 + $0xe8] sm:$0xff]
    %v1322 = vld [vmem:[%s1291 + $0xf0] sm:$0xff]
    %v1323 = vld [vmem:[%s1291 + $0xf8] sm:$0xff]
    %v1324 = vld [vmem:[%s3] sm:$0x3]
    %1326 = vset.pattern.permute.xlu0 0
    %1327 = vperm.xlu0 %1326, %v1292
    %v1328 = vpop.permute.xlu0 %1327
    %1331 = vset.pattern.permute.xlu0 0
    %1332 = vperm.xlu0 %1331, %v1293
    %v1333 = vpop.permute.xlu0 %1332
    %1336 = vset.pattern.permute.xlu0 0
    %1337 = vperm.xlu0 %1336, %v1294
    %v1338 = vpop.permute.xlu0 %1337
    %1341 = vset.pattern.permute.xlu0 0
    %1342 = vperm.xlu0 %1341, %v1295
    %v1343 = vpop.permute.xlu0 %1342
    %1346 = vset.pattern.permute.xlu0 0
    %1347 = vperm.xlu0 %1346, %v1296
    %v1348 = vpop.permute.xlu0 %1347
    %1351 = vset.pattern.permute.xlu0 0
    %1352 = vperm.xlu0 %1351, %v1297
    %v1353 = vpop.permute.xlu0 %1352
    %1356 = vset.pattern.permute.xlu0 0
    %1357 = vperm.xlu0 %1356, %v1298
    %v1358 = vpop.permute.xlu0 %1357
    %1361 = vset.pattern.permute.xlu0 0
    %1362 = vperm.xlu0 %1361, %v1299
    %v1363 = vpop.permute.xlu0 %1362
    %1366 = vset.pattern.permute.xlu0 0
    %1367 = vperm.xlu0 %1366, %v1300
    %v1368 = vpop.permute.xlu0 %1367
    %1371 = vset.pattern.permute.xlu0 0
    %1372 = vperm.xlu0 %1371, %v1301
    %v1373 = vpop.permute.xlu0 %1372
    %1376 = vset.pattern.permute.xlu0 0
    %1377 = vperm.xlu0 %1376, %v1302
    %v1378 = vpop.permute.xlu0 %1377
    %1381 = vset.pattern.permute.xlu0 0
    %1382 = vperm.xlu0 %1381, %v1303
    %v1383 = vpop.permute.xlu0 %1382
    %1386 = vset.pattern.permute.xlu0 0
    %1387 = vperm.xlu0 %1386, %v1304
    %v1388 = vpop.permute.xlu0 %1387
    %1391 = vset.pattern.permute.xlu0 0
    %1392 = vperm.xlu0 %1391, %v1305
    %v1393 = vpop.permute.xlu0 %1392
    %1396 = vset.pattern.permute.xlu0 0
    %1397 = vperm.xlu0 %1396, %v1306
    %v1398 = vpop.permute.xlu0 %1397
    %1401 = vset.pattern.permute.xlu0 0
    %1402 = vperm.xlu0 %1401, %v1307
    %v1403 = vpop.permute.xlu0 %1402
    %1406 = vset.pattern.permute.xlu0 0
    %1407 = vperm.xlu0 %1406, %v1308
    %v1408 = vpop.permute.xlu0 %1407
    %1411 = vset.pattern.permute.xlu0 0
    %1412 = vperm.xlu0 %1411, %v1309
    %v1413 = vpop.permute.xlu0 %1412
    %1416 = vset.pattern.permute.xlu0 0
    %1417 = vperm.xlu0 %1416, %v1310
    %v1418 = vpop.permute.xlu0 %1417
    %1421 = vset.pattern.permute.xlu0 0
    %1422 = vperm.xlu0 %1421, %v1311
    %v1423 = vpop.permute.xlu0 %1422
    %1426 = vset.pattern.permute.xlu0 0
    %1427 = vperm.xlu0 %1426, %v1312
    %v1428 = vpop.permute.xlu0 %1427
    %1431 = vset.pattern.permute.xlu0 0
    %1432 = vperm.xlu0 %1431, %v1313
    %v1433 = vpop.permute.xlu0 %1432
    %1436 = vset.pattern.permute.xlu0 0
    %1437 = vperm.xlu0 %1436, %v1314
    %v1438 = vpop.permute.xlu0 %1437
    %1441 = vset.pattern.permute.xlu0 0
    %1442 = vperm.xlu0 %1441, %v1315
    %v1443 = vpop.permute.xlu0 %1442
    %1446 = vset.pattern.permute.xlu0 0
    %1447 = vperm.xlu0 %1446, %v1316
    %v1448 = vpop.permute.xlu0 %1447
    %1451 = vset.pattern.permute.xlu0 0
    %1452 = vperm.xlu0 %1451, %v1317
    %v1453 = vpop.permute.xlu0 %1452
    %1456 = vset.pattern.permute.xlu0 0
    %1457 = vperm.xlu0 %1456, %v1318
    %v1458 = vpop.permute.xlu0 %1457
    %1461 = vset.pattern.permute.xlu0 0
    %1462 = vperm.xlu0 %1461, %v1319
    %v1463 = vpop.permute.xlu0 %1462
    %1466 = vset.pattern.permute.xlu0 0
    %1467 = vperm.xlu0 %1466, %v1320
    %v1468 = vpop.permute.xlu0 %1467
    %1471 = vset.pattern.permute.xlu0 0
    %1472 = vperm.xlu0 %1471, %v1321
    %v1473 = vpop.permute.xlu0 %1472
    %1476 = vset.pattern.permute.xlu0 0
    %1477 = vperm.xlu0 %1476, %v1322
    %v1478 = vpop.permute.xlu0 %1477
    %1481 = vset.pattern.permute.xlu0 0
    %1482 = vperm.xlu0 %1481, %v1323
    %v1483 = vpop.permute.xlu0 %1482
    %v1486 = vlaneseq
    %v1487 = vshrl.u32 %v1486, 7
    %v1488 = vsub.s32 0, %v1487
    %v1489 = vrot.slane %v1324, %v1488
    %v1490 = vlaneseq
    %v1491 = vshrl.u32 %v1490, 7
    %v1492 = vsub.s32 1, %v1491
    %v1493 = vrot.slane %v1324, %v1492
    %vm1496 = vcmp.eq.f32.partialorder %v1328, %v1489
    %vm1497 = vcmp.eq.f32.partialorder %v1328, %v1493
    %vm1498 = vcmp.eq.f32.partialorder %v1333, %v1489
    %vm1499 = vcmp.eq.f32.partialorder %v1333, %v1493
    %vm1500 = vcmp.eq.f32.partialorder %v1338, %v1489
    %vm1501 = vcmp.eq.f32.partialorder %v1338, %v1493
    %vm1502 = vcmp.eq.f32.partialorder %v1343, %v1489
    %vm1503 = vcmp.eq.f32.partialorder %v1343, %v1493
    %vm1504 = vcmp.eq.f32.partialorder %v1348, %v1489
    %vm1505 = vcmp.eq.f32.partialorder %v1348, %v1493
    %vm1506 = vcmp.eq.f32.partialorder %v1353, %v1489
    %vm1507 = vcmp.eq.f32.partialorder %v1353, %v1493
    %vm1508 = vcmp.eq.f32.partialorder %v1358, %v1489
    %vm1509 = vcmp.eq.f32.partialorder %v1358, %v1493
    %vm1510 = vcmp.eq.f32.partialorder %v1363, %v1489
    %vm1511 = vcmp.eq.f32.partialorder %v1363, %v1493
    %vm1512 = vcmp.eq.f32.partialorder %v1368, %v1489
    %vm1513 = vcmp.eq.f32.partialorder %v1368, %v1493
    %vm1514 = vcmp.eq.f32.partialorder %v1373, %v1489
    %vm1515 = vcmp.eq.f32.partialorder %v1373, %v1493
    %vm1516 = vcmp.eq.f32.partialorder %v1378, %v1489
    %vm1517 = vcmp.eq.f32.partialorder %v1378, %v1493
    %vm1518 = vcmp.eq.f32.partialorder %v1383, %v1489
    %vm1519 = vcmp.eq.f32.partialorder %v1383, %v1493
    %vm1520 = vcmp.eq.f32.partialorder %v1388, %v1489
    %vm1521 = vcmp.eq.f32.partialorder %v1388, %v1493
    %vm1522 = vcmp.eq.f32.partialorder %v1393, %v1489
    %vm1523 = vcmp.eq.f32.partialorder %v1393, %v1493
    %vm1524 = vcmp.eq.f32.partialorder %v1398, %v1489
    %vm1525 = vcmp.eq.f32.partialorder %v1398, %v1493
    %vm1526 = vcmp.eq.f32.partialorder %v1403, %v1489
    %vm1527 = vcmp.eq.f32.partialorder %v1403, %v1493
    %vm1528 = vcmp.eq.f32.partialorder %v1408, %v1489
    %vm1529 = vcmp.eq.f32.partialorder %v1408, %v1493
    %vm1530 = vcmp.eq.f32.partialorder %v1413, %v1489
    %vm1531 = vcmp.eq.f32.partialorder %v1413, %v1493
    %vm1532 = vcmp.eq.f32.partialorder %v1418, %v1489
    %vm1533 = vcmp.eq.f32.partialorder %v1418, %v1493
    %vm1534 = vcmp.eq.f32.partialorder %v1423, %v1489
    %vm1535 = vcmp.eq.f32.partialorder %v1423, %v1493
    %vm1536 = vcmp.eq.f32.partialorder %v1428, %v1489
    %vm1537 = vcmp.eq.f32.partialorder %v1428, %v1493
    %vm1538 = vcmp.eq.f32.partialorder %v1433, %v1489
    %vm1539 = vcmp.eq.f32.partialorder %v1433, %v1493
    %vm1540 = vcmp.eq.f32.partialorder %v1438, %v1489
    %vm1541 = vcmp.eq.f32.partialorder %v1438, %v1493
    %vm1542 = vcmp.eq.f32.partialorder %v1443, %v1489
    %vm1543 = vcmp.eq.f32.partialorder %v1443, %v1493
    %vm1544 = vcmp.eq.f32.partialorder %v1448, %v1489
    %vm1545 = vcmp.eq.f32.partialorder %v1448, %v1493
    %vm1546 = vcmp.eq.f32.partialorder %v1453, %v1489
    %vm1547 = vcmp.eq.f32.partialorder %v1453, %v1493
    %vm1548 = vcmp.eq.f32.partialorder %v1458, %v1489
    %vm1549 = vcmp.eq.f32.partialorder %v1458, %v1493
    %vm1550 = vcmp.eq.f32.partialorder %v1463, %v1489
    %vm1551 = vcmp.eq.f32.partialorder %v1463, %v1493
    %vm1552 = vcmp.eq.f32.partialorder %v1468, %v1489
    %vm1553 = vcmp.eq.f32.partialorder %v1468, %v1493
    %vm1554 = vcmp.eq.f32.partialorder %v1473, %v1489
    %vm1555 = vcmp.eq.f32.partialorder %v1473, %v1493
    %vm1556 = vcmp.eq.f32.partialorder %v1478, %v1489
    %vm1557 = vcmp.eq.f32.partialorder %v1478, %v1493
    %vm1558 = vcmp.eq.f32.partialorder %v1483, %v1489
    %vm1559 = vcmp.eq.f32.partialorder %v1483, %v1493
    %s1560 = sld [smem:[#allocation5]]
    %v1561 = vsub.f32 %v1227, 1.0
    %v1562 = vsub.f32 %v1228, 1.0
    %v1563 = vsub.f32 %v1229, 1.0
    %v1564 = vsub.f32 %v1230, 1.0
    %v1565 = vsub.f32 %v1231, 1.0
    %v1566 = vsub.f32 %v1232, 1.0
    %v1567 = vsub.f32 %v1233, 1.0
    %v1568 = vsub.f32 %v1234, 1.0
    %v1569 = vsub.f32 %v1235, 1.0
    %v1570 = vsub.f32 %v1236, 1.0
    %v1571 = vsub.f32 %v1237, 1.0
    %v1572 = vsub.f32 %v1238, 1.0
    %v1573 = vsub.f32 %v1239, 1.0
    %v1574 = vsub.f32 %v1240, 1.0
    %v1575 = vsub.f32 %v1241, 1.0
    %v1576 = vsub.f32 %v1242, 1.0
    %v1577 = vsub.f32 %v1243, 1.0
    %v1578 = vsub.f32 %v1244, 1.0
    %v1579 = vsub.f32 %v1245, 1.0
    %v1580 = vsub.f32 %v1246, 1.0
    %v1581 = vsub.f32 %v1247, 1.0
    %v1582 = vsub.f32 %v1248, 1.0
    %v1583 = vsub.f32 %v1249, 1.0
    %v1584 = vsub.f32 %v1250, 1.0
    %v1585 = vsub.f32 %v1251, 1.0
    %v1586 = vsub.f32 %v1252, 1.0
    %v1587 = vsub.f32 %v1253, 1.0
    %v1588 = vsub.f32 %v1254, 1.0
    %v1589 = vsub.f32 %v1255, 1.0
    %v1590 = vsub.f32 %v1256, 1.0
    %v1591 = vsub.f32 %v1257, 1.0
    %v1592 = vsub.f32 %v1258, 1.0
    %v1593 = vsub.f32 %v1259, 1.0
    %v1594 = vsub.f32 %v1260, 1.0
    %v1595 = vsub.f32 %v1261, 1.0
    %v1596 = vsub.f32 %v1262, 1.0
    %v1597 = vsub.f32 %v1263, 1.0
    %v1598 = vsub.f32 %v1264, 1.0
    %v1599 = vsub.f32 %v1265, 1.0
    %v1600 = vsub.f32 %v1266, 1.0
    %v1601 = vsub.f32 %v1267, 1.0
    %v1602 = vsub.f32 %v1268, 1.0
    %v1603 = vsub.f32 %v1269, 1.0
    %v1604 = vsub.f32 %v1270, 1.0
    %v1605 = vsub.f32 %v1271, 1.0
    %v1606 = vsub.f32 %v1272, 1.0
    %v1607 = vsub.f32 %v1273, 1.0
    %v1608 = vsub.f32 %v1274, 1.0
    %v1609 = vsub.f32 %v1275, 1.0
    %v1610 = vsub.f32 %v1276, 1.0
    %v1611 = vsub.f32 %v1277, 1.0
    %v1612 = vsub.f32 %v1278, 1.0
    %v1613 = vsub.f32 %v1279, 1.0
    %v1614 = vsub.f32 %v1280, 1.0
    %v1615 = vsub.f32 %v1281, 1.0
    %v1616 = vsub.f32 %v1282, 1.0
    %v1617 = vsub.f32 %v1283, 1.0
    %v1618 = vsub.f32 %v1284, 1.0
    %v1619 = vsub.f32 %v1285, 1.0
    %v1620 = vsub.f32 %v1286, 1.0
    %v1621 = vsub.f32 %v1287, 1.0
    %v1622 = vsub.f32 %v1288, 1.0
    %v1623 = vsub.f32 %v1289, 1.0
    %v1624 = vsub.f32 %v1290, 1.0
    %v1625 = vmul.f32 %v1561, %v1561
    %v1626 = vmul.f32 %v1562, %v1562
    %v1627 = vmul.f32 %v1563, %v1563
    %v1628 = vmul.f32 %v1564, %v1564
    %v1629 = vmul.f32 %v1565, %v1565
    %v1630 = vmul.f32 %v1566, %v1566
    %v1631 = vmul.f32 %v1567, %v1567
    %v1632 = vmul.f32 %v1568, %v1568
    %v1633 = vmul.f32 %v1569, %v1569
    %v1634 = vmul.f32 %v1570, %v1570
    %v1635 = vmul.f32 %v1571, %v1571
    %v1636 = vmul.f32 %v1572, %v1572
    %v1637 = vmul.f32 %v1573, %v1573
    %v1638 = vmul.f32 %v1574, %v1574
    %v1639 = vmul.f32 %v1575, %v1575
    %v1640 = vmul.f32 %v1576, %v1576
    %v1641 = vmul.f32 %v1577, %v1577
    %v1642 = vmul.f32 %v1578, %v1578
    %v1643 = vmul.f32 %v1579, %v1579
    %v1644 = vmul.f32 %v1580, %v1580
    %v1645 = vmul.f32 %v1581, %v1581
    %v1646 = vmul.f32 %v1582, %v1582
    %v1647 = vmul.f32 %v1583, %v1583
    %v1648 = vmul.f32 %v1584, %v1584
    %v1649 = vmul.f32 %v1585, %v1585
    %v1650 = vmul.f32 %v1586, %v1586
    %v1651 = vmul.f32 %v1587, %v1587
    %v1652 = vmul.f32 %v1588, %v1588
    %v1653 = vmul.f32 %v1589, %v1589
    %v1654 = vmul.f32 %v1590, %v1590
    %v1655 = vmul.f32 %v1591, %v1591
    %v1656 = vmul.f32 %v1592, %v1592
    %v1657 = vmul.f32 %v1593, %v1593
    %v1658 = vmul.f32 %v1594, %v1594
    %v1659 = vmul.f32 %v1595, %v1595
    %v1660 = vmul.f32 %v1596, %v1596
    %v1661 = vmul.f32 %v1597, %v1597
    %v1662 = vmul.f32 %v1598, %v1598
    %v1663 = vmul.f32 %v1599, %v1599
    %v1664 = vmul.f32 %v1600, %v1600
    %v1665 = vmul.f32 %v1601, %v1601
    %v1666 = vmul.f32 %v1602, %v1602
    %v1667 = vmul.f32 %v1603, %v1603
    %v1668 = vmul.f32 %v1604, %v1604
    %v1669 = vmul.f32 %v1605, %v1605
    %v1670 = vmul.f32 %v1606, %v1606
    %v1671 = vmul.f32 %v1607, %v1607
    %v1672 = vmul.f32 %v1608, %v1608
    %v1673 = vmul.f32 %v1609, %v1609
    %v1674 = vmul.f32 %v1610, %v1610
    %v1675 = vmul.f32 %v1611, %v1611
    %v1676 = vmul.f32 %v1612, %v1612
    %v1677 = vmul.f32 %v1613, %v1613
    %v1678 = vmul.f32 %v1614, %v1614
    %v1679 = vmul.f32 %v1615, %v1615
    %v1680 = vmul.f32 %v1616, %v1616
    %v1681 = vmul.f32 %v1617, %v1617
    %v1682 = vmul.f32 %v1618, %v1618
    %v1683 = vmul.f32 %v1619, %v1619
    %v1684 = vmul.f32 %v1620, %v1620
    %v1685 = vmul.f32 %v1621, %v1621
    %v1686 = vmul.f32 %v1622, %v1622
    %v1687 = vmul.f32 %v1623, %v1623
    %v1688 = vmul.f32 %v1624, %v1624
    %v1689 = vsel %vm1496, %v1625, 1.0
    %v1690 = vsel %vm1497, %v1626, 1.0
    %v1691 = vsel %vm1498, %v1627, 1.0
    %v1692 = vsel %vm1499, %v1628, 1.0
    %v1693 = vsel %vm1500, %v1629, 1.0
    %v1694 = vsel %vm1501, %v1630, 1.0
    %v1695 = vsel %vm1502, %v1631, 1.0
    %v1696 = vsel %vm1503, %v1632, 1.0
    %v1697 = vsel %vm1504, %v1633, 1.0
    %v1698 = vsel %vm1505, %v1634, 1.0
    %v1699 = vsel %vm1506, %v1635, 1.0
    %v1700 = vsel %vm1507, %v1636, 1.0
    %v1701 = vsel %vm1508, %v1637, 1.0
    %v1702 = vsel %vm1509, %v1638, 1.0
    %v1703 = vsel %vm1510, %v1639, 1.0
    %v1704 = vsel %vm1511, %v1640, 1.0
    %v1705 = vsel %vm1512, %v1641, 1.0
    %v1706 = vsel %vm1513, %v1642, 1.0
    %v1707 = vsel %vm1514, %v1643, 1.0
    %v1708 = vsel %vm1515, %v1644, 1.0
    %v1709 = vsel %vm1516, %v1645, 1.0
    %v1710 = vsel %vm1517, %v1646, 1.0
    %v1711 = vsel %vm1518, %v1647, 1.0
    %v1712 = vsel %vm1519, %v1648, 1.0
    %v1713 = vsel %vm1520, %v1649, 1.0
    %v1714 = vsel %vm1521, %v1650, 1.0
    %v1715 = vsel %vm1522, %v1651, 1.0
    %v1716 = vsel %vm1523, %v1652, 1.0
    %v1717 = vsel %vm1524, %v1653, 1.0
    %v1718 = vsel %vm1525, %v1654, 1.0
    %v1719 = vsel %vm1526, %v1655, 1.0
    %v1720 = vsel %vm1527, %v1656, 1.0
    %v1721 = vsel %vm1528, %v1657, 1.0
    %v1722 = vsel %vm1529, %v1658, 1.0
    %v1723 = vsel %vm1530, %v1659, 1.0
    %v1724 = vsel %vm1531, %v1660, 1.0
    %v1725 = vsel %vm1532, %v1661, 1.0
    %v1726 = vsel %vm1533, %v1662, 1.0
    %v1727 = vsel %vm1534, %v1663, 1.0
    %v1728 = vsel %vm1535, %v1664, 1.0
    %v1729 = vsel %vm1536, %v1665, 1.0
    %v1730 = vsel %vm1537, %v1666, 1.0
    %v1731 = vsel %vm1538, %v1667, 1.0
    %v1732 = vsel %vm1539, %v1668, 1.0
    %v1733 = vsel %vm1540, %v1669, 1.0
    %v1734 = vsel %vm1541, %v1670, 1.0
    %v1735 = vsel %vm1542, %v1671, 1.0
    %v1736 = vsel %vm1543, %v1672, 1.0
    %v1737 = vsel %vm1544, %v1673, 1.0
    %v1738 = vsel %vm1545, %v1674, 1.0
    %v1739 = vsel %vm1546, %v1675, 1.0
    %v1740 = vsel %vm1547, %v1676, 1.0
    %v1741 = vsel %vm1548, %v1677, 1.0
    %v1742 = vsel %vm1549, %v1678, 1.0
    %v1743 = vsel %vm1550, %v1679, 1.0
    %v1744 = vsel %vm1551, %v1680, 1.0
    %v1745 = vsel %vm1552, %v1681, 1.0
    %v1746 = vsel %vm1553, %v1682, 1.0
    %v1747 = vsel %vm1554, %v1683, 1.0
    %v1748 = vsel %vm1555, %v1684, 1.0
    %v1749 = vsel %vm1556, %v1685, 1.0
    %v1750 = vsel %vm1557, %v1686, 1.0
    %v1751 = vsel %vm1558, %v1687, 1.0
    %v1752 = vsel %vm1559, %v1688, 1.0
    %v1753 = vmul.f32 %v1227, %v1227
    %v1754 = vmul.f32 %v1228, %v1228
    %v1755 = vmul.f32 %v1229, %v1229
    %v1756 = vmul.f32 %v1230, %v1230
    %v1757 = vmul.f32 %v1231, %v1231
    %v1758 = vmul.f32 %v1232, %v1232
    %v1759 = vmul.f32 %v1233, %v1233
    %v1760 = vmul.f32 %v1234, %v1234
    %v1761 = vmul.f32 %v1235, %v1235
    %v1762 = vmul.f32 %v1236, %v1236
    %v1763 = vmul.f32 %v1237, %v1237
    %v1764 = vmul.f32 %v1238, %v1238
    %v1765 = vmul.f32 %v1239, %v1239
    %v1766 = vmul.f32 %v1240, %v1240
    %v1767 = vmul.f32 %v1241, %v1241
    %v1768 = vmul.f32 %v1242, %v1242
    %v1769 = vmul.f32 %v1243, %v1243
    %v1770 = vmul.f32 %v1244, %v1244
    %v1771 = vmul.f32 %v1245, %v1245
    %v1772 = vmul.f32 %v1246, %v1246
    %v1773 = vmul.f32 %v1247, %v1247
    %v1774 = vmul.f32 %v1248, %v1248
    %v1775 = vmul.f32 %v1249, %v1249
    %v1776 = vmul.f32 %v1250, %v1250
    %v1777 = vmul.f32 %v1251, %v1251
    %v1778 = vmul.f32 %v1252, %v1252
    %v1779 = vmul.f32 %v1253, %v1253
    %v1780 = vmul.f32 %v1254, %v1254
    %v1781 = vmul.f32 %v1255, %v1255
    %v1782 = vmul.f32 %v1256, %v1256
    %v1783 = vmul.f32 %v1257, %v1257
    %v1784 = vmul.f32 %v1258, %v1258
    %v1785 = vmul.f32 %v1259, %v1259
    %v1786 = vmul.f32 %v1260, %v1260
    %v1787 = vmul.f32 %v1261, %v1261
    %v1788 = vmul.f32 %v1262, %v1262
    %v1789 = vmul.f32 %v1263, %v1263
    %v1790 = vmul.f32 %v1264, %v1264
    %v1791 = vmul.f32 %v1265, %v1265
    %v1792 = vmul.f32 %v1266, %v1266
    %v1793 = vmul.f32 %v1267, %v1267
    %v1794 = vmul.f32 %v1268, %v1268
    %v1795 = vmul.f32 %v1269, %v1269
    %v1796 = vmul.f32 %v1270, %v1270
    %v1797 = vmul.f32 %v1271, %v1271
    %v1798 = vmul.f32 %v1272, %v1272
    %v1799 = vmul.f32 %v1273, %v1273
    %v1800 = vmul.f32 %v1274, %v1274
    %v1801 = vmul.f32 %v1275, %v1275
    %v1802 = vmul.f32 %v1276, %v1276
    %v1803 = vmul.f32 %v1277, %v1277
    %v1804 = vmul.f32 %v1278, %v1278
    %v1805 = vmul.f32 %v1279, %v1279
    %v1806 = vmul.f32 %v1280, %v1280
    %v1807 = vmul.f32 %v1281, %v1281
    %v1808 = vmul.f32 %v1282, %v1282
    %v1809 = vmul.f32 %v1283, %v1283
    %v1810 = vmul.f32 %v1284, %v1284
    %v1811 = vmul.f32 %v1285, %v1285
    %v1812 = vmul.f32 %v1286, %v1286
    %v1813 = vmul.f32 %v1287, %v1287
    %v1814 = vmul.f32 %v1288, %v1288
    %v1815 = vmul.f32 %v1289, %v1289
    %v1816 = vmul.f32 %v1290, %v1290
    %v1817 = vstv %s1560
    %v1818 = vmul.f32 %v1817, %v1753
    %v1819 = vmul.f32 %v1817, %v1754
    %v1820 = vmul.f32 %v1817, %v1755
    %v1821 = vmul.f32 %v1817, %v1756
    %v1822 = vmul.f32 %v1817, %v1757
    %v1823 = vmul.f32 %v1817, %v1758
    %v1824 = vmul.f32 %v1817, %v1759
    %v1825 = vmul.f32 %v1817, %v1760
    %v1826 = vmul.f32 %v1817, %v1761
    %v1827 = vmul.f32 %v1817, %v1762
    %v1828 = vmul.f32 %v1817, %v1763
    %v1829 = vmul.f32 %v1817, %v1764
    %v1830 = vmul.f32 %v1817, %v1765
    %v1831 = vmul.f32 %v1817, %v1766
    %v1832 = vmul.f32 %v1817, %v1767
    %v1833 = vmul.f32 %v1817, %v1768
    %v1834 = vmul.f32 %v1817, %v1769
    %v1835 = vmul.f32 %v1817, %v1770
    %v1836 = vmul.f32 %v1817, %v1771
    %v1837 = vmul.f32 %v1817, %v1772
    %v1838 = vmul.f32 %v1817, %v1773
    %v1839 = vmul.f32 %v1817, %v1774
    %v1840 = vmul.f32 %v1817, %v1775
    %v1841 = vmul.f32 %v1817, %v1776
    %v1842 = vmul.f32 %v1817, %v1777
    %v1843 = vmul.f32 %v1817, %v1778
    %v1844 = vmul.f32 %v1817, %v1779
    %v1845 = vmul.f32 %v1817, %v1780
    %v1846 = vmul.f32 %v1817, %v1781
    %v1847 = vmul.f32 %v1817, %v1782
    %v1848 = vmul.f32 %v1817, %v1783
    %v1849 = vmul.f32 %v1817, %v1784
    %v1850 = vmul.f32 %v1817, %v1785
    %v1851 = vmul.f32 %v1817, %v1786
    %v1852 = vmul.f32 %v1817, %v1787
    %v1853 = vmul.f32 %v1817, %v1788
    %v1854 = vmul.f32 %v1817, %v1789
    %v1855 = vmul.f32 %v1817, %v1790
    %v1856 = vmul.f32 %v1817, %v1791
    %v1857 = vmul.f32 %v1817, %v1792
    %v1858 = vmul.f32 %v1817, %v1793
    %v1859 = vmul.f32 %v1817, %v1794
    %v1860 = vmul.f32 %v1817, %v1795
    %v1861 = vmul.f32 %v1817, %v1796
    %v1862 = vmul.f32 %v1817, %v1797
    %v1863 = vmul.f32 %v1817, %v1798
    %v1864 = vmul.f32 %v1817, %v1799
    %v1865 = vmul.f32 %v1817, %v1800
    %v1866 = vmul.f32 %v1817, %v1801
    %v1867 = vmul.f32 %v1817, %v1802
    %v1868 = vmul.f32 %v1817, %v1803
    %v1869 = vmul.f32 %v1817, %v1804
    %v1870 = vmul.f32 %v1817, %v1805
    %v1871 = vmul.f32 %v1817, %v1806
    %v1872 = vmul.f32 %v1817, %v1807
    %v1873 = vmul.f32 %v1817, %v1808
    %v1874 = vmul.f32 %v1817, %v1809
    %v1875 = vmul.f32 %v1817, %v1810
    %v1876 = vmul.f32 %v1817, %v1811
    %v1877 = vmul.f32 %v1817, %v1812
    %v1878 = vmul.f32 %v1817, %v1813
    %v1879 = vmul.f32 %v1817, %v1814
    %v1880 = vmul.f32 %v1817, %v1815
    %v1881 = vmul.f32 %v1817, %v1816
    %v1882 = vadd.f32 %v1689, %v1818
    %v1883 = vadd.f32 %v1690, %v1819
    %v1884 = vadd.f32 %v1691, %v1820
    %v1885 = vadd.f32 %v1692, %v1821
    %v1886 = vadd.f32 %v1693, %v1822
    %v1887 = vadd.f32 %v1694, %v1823
    %v1888 = vadd.f32 %v1695, %v1824
    %v1889 = vadd.f32 %v1696, %v1825
    %v1890 = vadd.f32 %v1697, %v1826
    %v1891 = vadd.f32 %v1698, %v1827
    %v1892 = vadd.f32 %v1699, %v1828
    %v1893 = vadd.f32 %v1700, %v1829
    %v1894 = vadd.f32 %v1701, %v1830
    %v1895 = vadd.f32 %v1702, %v1831
    %v1896 = vadd.f32 %v1703, %v1832
    %v1897 = vadd.f32 %v1704, %v1833
    %v1898 = vadd.f32 %v1705, %v1834
    %v1899 = vadd.f32 %v1706, %v1835
    %v1900 = vadd.f32 %v1707, %v1836
    %v1901 = vadd.f32 %v1708, %v1837
    %v1902 = vadd.f32 %v1709, %v1838
    %v1903 = vadd.f32 %v1710, %v1839
    %v1904 = vadd.f32 %v1711, %v1840
    %v1905 = vadd.f32 %v1712, %v1841
    %v1906 = vadd.f32 %v1713, %v1842
    %v1907 = vadd.f32 %v1714, %v1843
    %v1908 = vadd.f32 %v1715, %v1844
    %v1909 = vadd.f32 %v1716, %v1845
    %v1910 = vadd.f32 %v1717, %v1846
    %v1911 = vadd.f32 %v1718, %v1847
    %v1912 = vadd.f32 %v1719, %v1848
    %v1913 = vadd.f32 %v1720, %v1849
    %v1914 = vadd.f32 %v1721, %v1850
    %v1915 = vadd.f32 %v1722, %v1851
    %v1916 = vadd.f32 %v1723, %v1852
    %v1917 = vadd.f32 %v1724, %v1853
    %v1918 = vadd.f32 %v1725, %v1854
    %v1919 = vadd.f32 %v1726, %v1855
    %v1920 = vadd.f32 %v1727, %v1856
    %v1921 = vadd.f32 %v1728, %v1857
    %v1922 = vadd.f32 %v1729, %v1858
    %v1923 = vadd.f32 %v1730, %v1859
    %v1924 = vadd.f32 %v1731, %v1860
    %v1925 = vadd.f32 %v1732, %v1861
    %v1926 = vadd.f32 %v1733, %v1862
    %v1927 = vadd.f32 %v1734, %v1863
    %v1928 = vadd.f32 %v1735, %v1864
    %v1929 = vadd.f32 %v1736, %v1865
    %v1930 = vadd.f32 %v1737, %v1866
    %v1931 = vadd.f32 %v1738, %v1867
    %v1932 = vadd.f32 %v1739, %v1868
    %v1933 = vadd.f32 %v1740, %v1869
    %v1934 = vadd.f32 %v1741, %v1870
    %v1935 = vadd.f32 %v1742, %v1871
    %v1936 = vadd.f32 %v1743, %v1872
    %v1937 = vadd.f32 %v1744, %v1873
    %v1938 = vadd.f32 %v1745, %v1874
    %v1939 = vadd.f32 %v1746, %v1875
    %v1940 = vadd.f32 %v1747, %v1876
    %v1941 = vadd.f32 %v1748, %v1877
    %v1942 = vadd.f32 %v1749, %v1878
    %v1943 = vadd.f32 %v1750, %v1879
    %v1944 = vadd.f32 %v1751, %v1880
    %v1945 = vadd.f32 %v1752, %v1881
    %v1946 = vld [vmem:[#allocation3] sm:$0x3]
    %v1947 = vadd.f32 %v1882, %v1884
    %v1948 = vadd.f32 %v1947, %v1886
    %v1949 = vadd.f32 %v1948, %v1888
    %v1950 = vadd.f32 %v1949, %v1890
    %v1951 = vadd.f32 %v1950, %v1892
    %v1952 = vadd.f32 %v1951, %v1894
    %v1953 = vadd.f32 %v1952, %v1896
    %v1954 = vadd.f32 %v1953, %v1898
    %v1955 = vadd.f32 %v1954, %v1900
    %v1956 = vadd.f32 %v1955, %v1902
    %v1957 = vadd.f32 %v1956, %v1904
    %v1958 = vadd.f32 %v1957, %v1906
    %v1959 = vadd.f32 %v1958, %v1908
    %v1960 = vadd.f32 %v1959, %v1910
    %v1961 = vadd.f32 %v1960, %v1912
    %v1962 = vadd.f32 %v1961, %v1914
    %v1963 = vadd.f32 %v1962, %v1916
    %v1964 = vadd.f32 %v1963, %v1918
    %v1965 = vadd.f32 %v1964, %v1920
    %v1966 = vadd.f32 %v1965, %v1922
    %v1967 = vadd.f32 %v1966, %v1924
    %v1968 = vadd.f32 %v1967, %v1926
    %v1969 = vadd.f32 %v1968, %v1928
    %v1970 = vadd.f32 %v1969, %v1930
    %v1971 = vadd.f32 %v1970, %v1932
    %v1972 = vadd.f32 %v1971, %v1934
    %v1973 = vadd.f32 %v1972, %v1936
    %v1974 = vadd.f32 %v1973, %v1938
    %v1975 = vadd.f32 %v1974, %v1940
    %v1976 = vadd.f32 %v1975, %v1942
    %v1977 = vadd.f32 %v1976, %v1944
    %v1978 = vrot.slane %v1977, 4
    %v1979 = vadd.f32 %v1977, %v1978
    %v1980 = vrot.slane %v1979, 2
    %v1981 = vadd.f32 %v1979, %v1980
    %v1982 = vrot.slane %v1981, 1
    %v1983 = vadd.f32 %v1981, %v1982
    %v1984 = vadd.f32 %v1883, %v1885
    %v1985 = vadd.f32 %v1984, %v1887
    %v1986 = vadd.f32 %v1985, %v1889
    %v1987 = vadd.f32 %v1986, %v1891
    %v1988 = vadd.f32 %v1987, %v1893
    %v1989 = vadd.f32 %v1988, %v1895
    %v1990 = vadd.f32 %v1989, %v1897
    %v1991 = vadd.f32 %v1990, %v1899
    %v1992 = vadd.f32 %v1991, %v1901
    %v1993 = vadd.f32 %v1992, %v1903
    %v1994 = vadd.f32 %v1993, %v1905
    %v1995 = vadd.f32 %v1994, %v1907
    %v1996 = vadd.f32 %v1995, %v1909
    %v1997 = vadd.f32 %v1996, %v1911
    %v1998 = vadd.f32 %v1997, %v1913
    %v1999 = vadd.f32 %v1998, %v1915
    %v2000 = vadd.f32 %v1999, %v1917
    %v2001 = vadd.f32 %v2000, %v1919
    %v2002 = vadd.f32 %v2001, %v1921
    %v2003 = vadd.f32 %v2002, %v1923
    %v2004 = vadd.f32 %v2003, %v1925
    %v2005 = vadd.f32 %v2004, %v1927
    %v2006 = vadd.f32 %v2005, %v1929
    %v2007 = vadd.f32 %v2006, %v1931
    %v2008 = vadd.f32 %v2007, %v1933
    %v2009 = vadd.f32 %v2008, %v1935
    %v2010 = vadd.f32 %v2009, %v1937
    %v2011 = vadd.f32 %v2010, %v1939
    %v2012 = vadd.f32 %v2011, %v1941
    %v2013 = vadd.f32 %v2012, %v1943
    %v2014 = vadd.f32 %v2013, %v1945
    %v2015 = vrot.slane %v2014, 4
    %v2016 = vadd.f32 %v2014, %v2015
    %v2017 = vrot.slane %v2016, 2
    %v2018 = vadd.f32 %v2016, %v2017
    %v2019 = vrot.slane %v2018, 1
    %v2020 = vadd.f32 %v2018, %v2019
    %v2023 = vcombine.low %v1983, %v2020
    %v2025 = vunpack.c.l.s4 1966171168
    %v2026 = vunpack.c.0.s8 %v2025
    %v2027 = vlaneseq
    %v2028 = vshrl.u32 %v2027, 7
    %v2029 = vsub.s32 %v2026, %v2028
    %v2030 = vrot.slane %v2023, %v2029
    %v2032 = vunpack.c.l.s4 1966171168
    %v2033 = vunpack.c.0.s8 %v2032
    %v2034 = vlaneseq
    %v2035 = vshrl.u32 %v2034, 7
    %v2036 = vsub.s32 %v2033, %v2035
    %v2037 = vrot.slane %v2030, %v2036
    %v2039 = vadd.f32 %v1946, %v2037
    %v2040 = vlaneseq
    %vm2041 = vcmp.ge.s32.totalorder %v2040, 0
    %vm2042 = vcmp.lt.s32.totalorder %v2040, 256
    %vm2043 = vmand %vm2041, %vm2042
    %2044 = vst.msk [vmem:[#allocation3] sm:$0x3] %vm2043, %v2039
    // Predicated region
    $region22: #{tpu_custom_call.1} parent=1 // pred_check
      %p2045 = pneg %p19
    $region23: #{tpu_custom_call.1} parent=1 // pred_check_branch
      %2047 = sbr.rel (%p2045) target = $region25
    $region24: #{tpu_custom_call.1} parent=1 // pred_region
      %v2048 = vld [vmem:[#allocation3] sm:$0x3]
      %v2050 = vlaneseq
      %v2051 = vshrl.u32 %v2050, 7
      %v2052 = vsub.s32 0, %v2051
      %v2053 = vrot.slane %v2048, %v2052
      %v2054 = vlaneseq
      %v2055 = vshrl.u32 %v2054, 7
      %v2056 = vsub.s32 1, %v2055
      %v2057 = vrot.slane %v2048, %v2056
      %vm2060 = vcmask 1040384
      %v2061 = vsel %vm2060, %v2053, 0.0
      %v2062 = vsel %vm2060, %v2057, 0.0
      %v2063 = vadd.f32 %v2061, %v2062
      %2064 = vadd.xlane.f32.xlu0 %v2063
      %v2065 = vpop.xlane.xlu0 %2064
      %v2066 = vrot.slane %v2065, 4
      %v2067 = vadd.f32 %v2065, %v2066
      %v2068 = vrot.slane %v2067, 2
      %v2069 = vadd.f32 %v2067, %v2068
      %v2070 = vrot.slane %v2069, 1
      %v2071 = vadd.f32 %v2069, %v2070
      %s2072 = vtos %v2071
      %s2073 = smul.f32 %s2072, 1.5258789e-05
      %s2074 = sld [smem:[#allocation4]]
      %s2075 = smul.f32 %s2074, 0.1
      %s2076 = smul.f32 %s2075, 0.00012207031
      %s2077 = sadd.f32 %s2073, %s2076
      %s2078 = scalar_lea.smem [#allocation6], 0
      %2079 = sst [smem:[%s2078]] %s2077
    $region25: #{tpu_custom_call.1} parent=1 // pred_fallthru
      _
    // Predicated region
    $region26: #{tpu_custom_call.1} parent=1 // pred_check
      _
    $region27: #{tpu_custom_call.1} parent=1 // pred_check_branch
      %2081 = sbr.rel (0) target = $region29
    $region28: #{tpu_custom_call.1} parent=1 // pred_region
      %s2083 = ssub.s32 16, 16
      %2084 = vsyncadd [#allocation7], %s2083
      %2087 = dma.smem_to_hbm [#allocation6], 16, %s4, [#allocation7]
    $region29: #{tpu_custom_call.1} parent=1 // pred_fallthru
      _
    // Predicated region
    $region30: #{tpu_custom_call.1} parent=1 // pred_check
      _
    $region31: #{tpu_custom_call.1} parent=1 // pred_check_branch
      %2089 = sbr.rel (0) target = $region33
    $region32: #{tpu_custom_call.1} parent=1 // pred_region
      %2090 = dma.done [#allocation7], 16
    $region33: #{tpu_custom_call.1} parent=1 // pred_fallthru
      _
    %2091 = sfence
    %2092 = vsyncpa [#allocation7], 1

</llo_original>
